<compile_context>
chip_gen: v7x
topology: tpu7x:2x2x1
jax: 0.10.0
libtpu: 0.0.40
codegen_flags: <defaults>
</compile_context>

<pallas_src>
import functools

import jax
import jax.numpy as jnp
from jax.experimental import pallas as pl
from jax.experimental.pallas import tpu as pltpu

IN_FEATURES = 12
HIDDEN = 5
LANES = 128


# ----------------------------------------------------------------------------
# Parameter packing: one flat f32 vector (row-major [in, out] per layer).
# ----------------------------------------------------------------------------
_PARAM_ORDER = ["w_enc", "b_enc", "w_mu", "b_mu", "w_sig", "b_sig",
                "w_d1", "b_d1", "w_d2", "b_d2"]


def _param_offsets(latent):
    F, H, L = IN_FEATURES, HIDDEN, latent
    sizes = {"w_enc": F * H, "b_enc": H,
             "w_mu": H * L, "b_mu": L,
             "w_sig": H * L, "b_sig": L,
             "w_d1": L * H, "b_d1": H,
             "w_d2": H * F, "b_d2": F}
    offs, o = {}, 0
    for name in _PARAM_ORDER:
        offs[name] = o
        o += sizes[name]
    return offs, o


def pack_params(params):
    """Flatten all weights/biases into one 1-D f32 vector (lives in SMEM)."""
    return jnp.concatenate(
        [params[k].reshape(-1) for k in _PARAM_ORDER]).astype(jnp.float32)


# ----------------------------------------------------------------------------
# Kernel
# ----------------------------------------------------------------------------
def vae_kernel(x_ref, eps_ref, p_ref, out_ref, *, latent):
    """Feature-major VAE forward.

    x_ref:   [12, TS, 128]   f32 VMEM   (feature, batch-sublane, batch-lane)
    eps_ref: [L,  TS, 128]   f32 VMEM
    p_ref:   [P]             f32 SMEM   (flat packed params)
    out_ref: [12+2L, TS, 128] f32 VMEM  rows: 0..11 recon | 12..11+L mu | logvar
    """
    F, H, L = IN_FEATURES, HIDDEN, latent
    offs, _ = _param_offsets(L)

    def w(name, k, j, ncols):          # scalar weight read from SMEM
        return p_ref[offs[name] + k * ncols + j]

    def b(name, j):                    # scalar bias read from SMEM
        return p_ref[offs[name] + j]

    # encoder: h_j = relu(sum_k w_enc[k, j] * x_k + b_enc[j])
    # (the outer F.relu in the torch module is a redundant no-op)
    h = []
    for j in range(H):
        acc = x_ref[0, :, :] * w("w_enc", 0, j, H)
        for k in range(1, F):
            acc = acc + x_ref[k, :, :] * w("w_enc", k, j, H)
        h.append(jnp.maximum(acc + b("b_enc", j), 0.0))

    # heads: mu_j and sigma_j = softplus(.)
    mu, sig = [], []
    for j in range(L):
        m = h[0] * w("w_mu", 0, j, L)
        s = h[0] * w("w_sig", 0, j, L)
        for k in range(1, H):
            m = m + h[k] * w("w_mu", k, j, L)
            s = s + h[k] * w("w_sig", k, j, L)
        m = m + b("b_mu", j)
        s = s + b("b_sig", j)
        mu.append(m)
        # numerically-stable softplus: max(s, 0) + log1p(exp(-|s|))
        sig.append(jnp.maximum(s, 0.0) + jnp.log1p(jnp.exp(-jnp.abs(s))))

    # reparameterization
    z = [mu[j] + eps_ref[j, :, :] * sig[j] for j in range(L)]

    # decoder layer 1: Linear(L -> 5) + ReLU
    d = []
    for j in range(H):
        acc = z[0] * w("w_d1", 0, j, H)
        for k in range(1, L):
            acc = acc + z[k] * w("w_d1", k, j, H)
        d.append(jnp.maximum(acc + b("b_d1", j), 0.0))

    # decoder layer 2: Linear(5 -> 12) + exact sigmoid; write recon planes
    for j in range(F):
        acc = d[0] * w("w_d2", 0, j, F)
        for k in range(1, H):
            acc = acc + d[k] * w("w_d2", k, j, F)
        out_ref[j, :, :] = jax.nn.sigmoid(acc + b("b_d2", j))

    # mu / logvar planes (logvar = log(sigma**2) == 2*log(sigma))
    for j in range(L):
        out_ref[F + j, :, :] = mu[j]
        out_ref[F + L + j, :, :] = 2.0 * jnp.log(sig[j])


# ----------------------------------------------------------------------------
# Wrapper
# ----------------------------------------------------------------------------
def _round_up(a, m):
    return ((a + m - 1) // m) * m


def _choose_row_tile(rows_p):
    """Pick the batch tile in sublane-rows (each row = 128 batch elements)."""
    if rows_p <= 16:
        return rows_p
    # >= 2 grid steps so the "parallel" batch axis shards across v7x's two
    # TensorCores; cap at 64 rows = 8192 batch elems (~2.2 MiB double-buffered).
    return min(64, _round_up(rows_p // 2, 8))


def vae_forward(x, eps, packed_params):
    """x: [B, 12] f32, eps: [B, L] f32, packed_params: flat [P] f32."""
    B, F = x.shape
    L = eps.shape[1]
    assert F == IN_FEATURES

    rows = pl.cdiv(B, LANES)
    rows_p = _round_up(rows, 8)
    TS = _choose_row_tile(rows_p)
    rows_f = _round_up(rows_p, TS)
    Bp = rows_f * LANES

    # Layout plumbing: batch-in-lanes (feature-major) SoA views.
    xT = jnp.pad(x, ((0, Bp - B), (0, 0))).T.reshape(F, rows_f, LANES)
    eT = jnp.pad(eps, ((0, Bp - B), (0, 0))).T.reshape(L, rows_f, LANES)

    out_rows = F + 2 * L
    grid = (rows_f // TS,)

    out = pl.pallas_call(
        functools.partial(vae_kernel, latent=L),
        out_shape=jax.ShapeDtypeStruct((out_rows, rows_f, LANES), jnp.float32),
        grid=grid,
        in_specs=[
            pl.BlockSpec((F, TS, LANES), lambda i: (0, i, 0)),
            pl.BlockSpec((L, TS, LANES), lambda i: (0, i, 0)),
            pl.BlockSpec(memory_space=pltpu.MemorySpace.SMEM),  # flat params
        ],
        out_specs=pl.BlockSpec((out_rows, TS, LANES), lambda i: (0, i, 0)),
        compiler_params=pltpu.CompilerParams(
            dimension_semantics=("parallel",)),
    )(xT, eT, packed_params)

    out = out.reshape(out_rows, Bp).T[:B]      # back to [B, 12+2L]
    recon = out[:, :F]
    mu = out[:, F:F + L]
    logvar = out[:, F + L:F + 2 * L]
    return recon, mu, logvar


# ----------------------------------------------------------------------------
# Init + pure-JAX reference
# ----------------------------------------------------------------------------
def init_params(key, latent_dims):
    """PyTorch-style uniform(-1/sqrt(fan_in), 1/sqrt(fan_in)) init.

    Weights stored as [in_features, out_features]; biases as [1, out].
    """
    def linear(key, fan_in, fan_out):
        kw, kb = jax.random.split(key)
        bound = 1.0 / jnp.sqrt(jnp.float32(fan_in))
        w = jax.random.uniform(kw, (fan_in, fan_out), jnp.float32, -bound, bound)
        b = jax.random.uniform(kb, (1, fan_out), jnp.float32, -bound, bound)
        return w, b

    keys = jax.random.split(key, 5)
    w_enc, b_enc = linear(keys[0], IN_FEATURES, HIDDEN)
    w_mu, b_mu = linear(keys[1], HIDDEN, latent_dims)
    w_sig, b_sig = linear(keys[2], HIDDEN, latent_dims)
    w_d1, b_d1 = linear(keys[3], latent_dims, HIDDEN)
    w_d2, b_d2 = linear(keys[4], HIDDEN, IN_FEATURES)
    return dict(w_enc=w_enc, b_enc=b_enc, w_mu=w_mu, b_mu=b_mu,
                w_sig=w_sig, b_sig=b_sig, w_d1=w_d1, b_d1=b_d1,
                w_d2=w_d2, b_d2=b_d2)


def reference_forward(x, eps, params):
    h = jax.nn.relu(x @ params["w_enc"] + params["b_enc"])
    mu = h @ params["w_mu"] + params["b_mu"]
    sigma = jax.nn.softplus(h @ params["w_sig"] + params["b_sig"])
    z = mu + eps * sigma
    logvar = jnp.log(sigma ** 2)
    d = jax.nn.relu(z @ params["w_d1"] + params["b_d1"])
    recon = jax.nn.sigmoid(d @ params["w_d2"] + params["b_d2"])
    return recon, mu, logvar


if __name__ == "__main__":
    latent_dims = 3
    batch = 8

    key = jax.random.PRNGKey(0)
    k_x, k_eps, k_params = jax.random.split(key, 3)

    # Inputs: anything that flattens to [B, 12]; use [B, 3, 4] -> flatten.
    x_raw = jax.random.normal(k_x, (batch, 3, 4), dtype=jnp.float32)
    x = x_raw.reshape(batch, -1)                     # torch.flatten(x, start_dim=1)
    # TODO(synk): eps (torch.randn_like inside forward) is supplied as an input
    # instead of being drawn in-kernel.
    eps = jax.random.normal(k_eps, (batch, latent_dims), dtype=jnp.float32)

    params = init_params(k_params, latent_dims)
    packed = pack_params(params)

    recon, mu, log_var = vae_forward(x, eps, packed)
    jax.block_until_ready((recon, mu, log_var))

    assert recon.shape == (batch, IN_FEATURES)
    assert mu.shape == (batch, latent_dims)
    assert log_var.shape == (batch, latent_dims)

    # sanity check against a pure-JAX reference (exact sigmoid -> tight tol)
    r_ref, m_ref, lv_ref = reference_forward(x, eps, params)
    assert jnp.allclose(recon, r_ref, atol=1e-4, rtol=1e-4)
    assert jnp.allclose(mu, m_ref, atol=1e-4, rtol=1e-4)
    assert jnp.allclose(log_var, lv_ref, atol=1e-4, rtol=1e-4)

    print("KERNEL_OK")
</pallas_src>

<mosaic_0001>
module attributes {stable_mosaic.version = 11 : i64} {
  func.func @vae_kernel(%arg0: i32, %arg1: memref<12x8x128xf32, #tpu.memory_space<vmem>>, %arg2: memref<3x8x128xf32, #tpu.memory_space<vmem>>, %arg3: memref<193xf32, #tpu.memory_space<smem>>, %arg4: memref<18x8x128xf32, #tpu.memory_space<vmem>>) attributes {dimension_semantics = [#tpu.dimension_semantics<parallel>], iteration_bounds = array<i64: 1>, scalar_prefetch = 0 : i64, scratch_operands = 0 : i64, tpu.core_type = #tpu.core_type<tc>, window_params = [{transform_indices = @transform_0, window_bounds = array<i64: 12, 8, 128>}, {transform_indices = @transform_1, window_bounds = array<i64: 3, 8, 128>}, {transform_indices = @transform_2, window_bounds = array<i64: 193>}, {transform_indices = @transform_3, window_bounds = array<i64: 18, 8, 128>}]} {
    %c0 = arith.constant 0 : index
    %c0_0 = arith.constant 0 : index
    %c0_1 = arith.constant 0 : index
    %0 = vector.load %arg1[%c0, %c0_0, %c0_1] : memref<12x8x128xf32, #tpu.memory_space<vmem>>, vector<1x8x128xf32>
    %1 = vector.shape_cast %0 : vector<1x8x128xf32> to vector<8x128xf32>
    %c0_2 = arith.constant 0 : index
    %2 = memref.load %arg3[%c0_2] : memref<193xf32, #tpu.memory_space<smem>>
    %3 = vector.broadcast %2 : f32 to vector<8x128xf32>
    %4 = arith.mulf %1, %3 : vector<8x128xf32>
    %c1 = arith.constant 1 : index
    %c0_3 = arith.constant 0 : index
    %c0_4 = arith.constant 0 : index
    %5 = vector.load %arg1[%c1, %c0_3, %c0_4] : memref<12x8x128xf32, #tpu.memory_space<vmem>>, vector<1x8x128xf32>
    %6 = vector.shape_cast %5 : vector<1x8x128xf32> to vector<8x128xf32>
    %c5 = arith.constant 5 : index
    %7 = memref.load %arg3[%c5] : memref<193xf32, #tpu.memory_space<smem>>
    %8 = vector.broadcast %7 : f32 to vector<8x128xf32>
    %9 = arith.mulf %6, %8 : vector<8x128xf32>
    %10 = arith.addf %4, %9 : vector<8x128xf32>
    %c2 = arith.constant 2 : index
    %c0_5 = arith.constant 0 : index
    %c0_6 = arith.constant 0 : index
    %11 = vector.load %arg1[%c2, %c0_5, %c0_6] : memref<12x8x128xf32, #tpu.memory_space<vmem>>, vector<1x8x128xf32>
    %12 = vector.shape_cast %11 : vector<1x8x128xf32> to vector<8x128xf32>
    %c10 = arith.constant 10 : index
    %13 = memref.load %arg3[%c10] : memref<193xf32, #tpu.memory_space<smem>>
    %14 = vector.broadcast %13 : f32 to vector<8x128xf32>
    %15 = arith.mulf %12, %14 : vector<8x128xf32>
    %16 = arith.addf %10, %15 : vector<8x128xf32>
    %c3 = arith.constant 3 : index
    %c0_7 = arith.constant 0 : index
    %c0_8 = arith.constant 0 : index
    %17 = vector.load %arg1[%c3, %c0_7, %c0_8] : memref<12x8x128xf32, #tpu.memory_space<vmem>>, vector<1x8x128xf32>
    %18 = vector.shape_cast %17 : vector<1x8x128xf32> to vector<8x128xf32>
    %c15 = arith.constant 15 : index
    %19 = memref.load %arg3[%c15] : memref<193xf32, #tpu.memory_space<smem>>
    %20 = vector.broadcast %19 : f32 to vector<8x128xf32>
    %21 = arith.mulf %18, %20 : vector<8x128xf32>
    %22 = arith.addf %16, %21 : vector<8x128xf32>
    %c4 = arith.constant 4 : index
    %c0_9 = arith.constant 0 : index
    %c0_10 = arith.constant 0 : index
    %23 = vector.load %arg1[%c4, %c0_9, %c0_10] : memref<12x8x128xf32, #tpu.memory_space<vmem>>, vector<1x8x128xf32>
    %24 = vector.shape_cast %23 : vector<1x8x128xf32> to vector<8x128xf32>
    %c20 = arith.constant 20 : index
    %25 = memref.load %arg3[%c20] : memref<193xf32, #tpu.memory_space<smem>>
    %26 = vector.broadcast %25 : f32 to vector<8x128xf32>
    %27 = arith.mulf %24, %26 : vector<8x128xf32>
    %28 = arith.addf %22, %27 : vector<8x128xf32>
    %c5_11 = arith.constant 5 : index
    %c0_12 = arith.constant 0 : index
    %c0_13 = arith.constant 0 : index
    %29 = vector.load %arg1[%c5_11, %c0_12, %c0_13] : memref<12x8x128xf32, #tpu.memory_space<vmem>>, vector<1x8x128xf32>
    %30 = vector.shape_cast %29 : vector<1x8x128xf32> to vector<8x128xf32>
    %c25 = arith.constant 25 : index
    %31 = memref.load %arg3[%c25] : memref<193xf32, #tpu.memory_space<smem>>
    %32 = vector.broadcast %31 : f32 to vector<8x128xf32>
    %33 = arith.mulf %30, %32 : vector<8x128xf32>
    %34 = arith.addf %28, %33 : vector<8x128xf32>
    %c6 = arith.constant 6 : index
    %c0_14 = arith.constant 0 : index
    %c0_15 = arith.constant 0 : index
    %35 = vector.load %arg1[%c6, %c0_14, %c0_15] : memref<12x8x128xf32, #tpu.memory_space<vmem>>, vector<1x8x128xf32>
    %36 = vector.shape_cast %35 : vector<1x8x128xf32> to vector<8x128xf32>
    %c30 = arith.constant 30 : index
    %37 = memref.load %arg3[%c30] : memref<193xf32, #tpu.memory_space<smem>>
    %38 = vector.broadcast %37 : f32 to vector<8x128xf32>
    %39 = arith.mulf %36, %38 : vector<8x128xf32>
    %40 = arith.addf %34, %39 : vector<8x128xf32>
    %c7 = arith.constant 7 : index
    %c0_16 = arith.constant 0 : index
    %c0_17 = arith.constant 0 : index
    %41 = vector.load %arg1[%c7, %c0_16, %c0_17] : memref<12x8x128xf32, #tpu.memory_space<vmem>>, vector<1x8x128xf32>
    %42 = vector.shape_cast %41 : vector<1x8x128xf32> to vector<8x128xf32>
    %c35 = arith.constant 35 : index
    %43 = memref.load %arg3[%c35] : memref<193xf32, #tpu.memory_space<smem>>
    %44 = vector.broadcast %43 : f32 to vector<8x128xf32>
    %45 = arith.mulf %42, %44 : vector<8x128xf32>
    %46 = arith.addf %40, %45 : vector<8x128xf32>
    %c8 = arith.constant 8 : index
    %c0_18 = arith.constant 0 : index
    %c0_19 = arith.constant 0 : index
    %47 = vector.load %arg1[%c8, %c0_18, %c0_19] : memref<12x8x128xf32, #tpu.memory_space<vmem>>, vector<1x8x128xf32>
    %48 = vector.shape_cast %47 : vector<1x8x128xf32> to vector<8x128xf32>
    %c40 = arith.constant 40 : index
    %49 = memref.load %arg3[%c40] : memref<193xf32, #tpu.memory_space<smem>>
    %50 = vector.broadcast %49 : f32 to vector<8x128xf32>
    %51 = arith.mulf %48, %50 : vector<8x128xf32>
    %52 = arith.addf %46, %51 : vector<8x128xf32>
    %c9 = arith.constant 9 : index
    %c0_20 = arith.constant 0 : index
    %c0_21 = arith.constant 0 : index
    %53 = vector.load %arg1[%c9, %c0_20, %c0_21] : memref<12x8x128xf32, #tpu.memory_space<vmem>>, vector<1x8x128xf32>
    %54 = vector.shape_cast %53 : vector<1x8x128xf32> to vector<8x128xf32>
    %c45 = arith.constant 45 : index
    %55 = memref.load %arg3[%c45] : memref<193xf32, #tpu.memory_space<smem>>
    %56 = vector.broadcast %55 : f32 to vector<8x128xf32>
    %57 = arith.mulf %54, %56 : vector<8x128xf32>
    %58 = arith.addf %52, %57 : vector<8x128xf32>
    %c10_22 = arith.constant 10 : index
    %c0_23 = arith.constant 0 : index
    %c0_24 = arith.constant 0 : index
    %59 = vector.load %arg1[%c10_22, %c0_23, %c0_24] : memref<12x8x128xf32, #tpu.memory_space<vmem>>, vector<1x8x128xf32>
    %60 = vector.shape_cast %59 : vector<1x8x128xf32> to vector<8x128xf32>
    %c50 = arith.constant 50 : index
    %61 = memref.load %arg3[%c50] : memref<193xf32, #tpu.memory_space<smem>>
    %62 = vector.broadcast %61 : f32 to vector<8x128xf32>
    %63 = arith.mulf %60, %62 : vector<8x128xf32>
    %64 = arith.addf %58, %63 : vector<8x128xf32>
    %c11 = arith.constant 11 : index
    %c0_25 = arith.constant 0 : index
    %c0_26 = arith.constant 0 : index
    %65 = vector.load %arg1[%c11, %c0_25, %c0_26] : memref<12x8x128xf32, #tpu.memory_space<vmem>>, vector<1x8x128xf32>
    %66 = vector.shape_cast %65 : vector<1x8x128xf32> to vector<8x128xf32>
    %c55 = arith.constant 55 : index
    %67 = memref.load %arg3[%c55] : memref<193xf32, #tpu.memory_space<smem>>
    %68 = vector.broadcast %67 : f32 to vector<8x128xf32>
    %69 = arith.mulf %66, %68 : vector<8x128xf32>
    %70 = arith.addf %64, %69 : vector<8x128xf32>
    %c60 = arith.constant 60 : index
    %71 = memref.load %arg3[%c60] : memref<193xf32, #tpu.memory_space<smem>>
    %72 = vector.broadcast %71 : f32 to vector<8x128xf32>
    %73 = arith.addf %70, %72 : vector<8x128xf32>
    %cst = arith.constant 0.000000e+00 : f32
    %74 = vector.broadcast %cst : f32 to vector<8x128xf32>
    %75 = arith.maximumf %73, %74 : vector<8x128xf32>
    %c0_27 = arith.constant 0 : index
    %c0_28 = arith.constant 0 : index
    %c0_29 = arith.constant 0 : index
    %76 = vector.load %arg1[%c0_27, %c0_28, %c0_29] : memref<12x8x128xf32, #tpu.memory_space<vmem>>, vector<1x8x128xf32>
    %77 = vector.shape_cast %76 : vector<1x8x128xf32> to vector<8x128xf32>
    %c1_30 = arith.constant 1 : index
    %78 = memref.load %arg3[%c1_30] : memref<193xf32, #tpu.memory_space<smem>>
    %79 = vector.broadcast %78 : f32 to vector<8x128xf32>
    %80 = arith.mulf %77, %79 : vector<8x128xf32>
    %c1_31 = arith.constant 1 : index
    %c0_32 = arith.constant 0 : index
    %c0_33 = arith.constant 0 : index
    %81 = vector.load %arg1[%c1_31, %c0_32, %c0_33] : memref<12x8x128xf32, #tpu.memory_space<vmem>>, vector<1x8x128xf32>
    %82 = vector.shape_cast %81 : vector<1x8x128xf32> to vector<8x128xf32>
    %c6_34 = arith.constant 6 : index
    %83 = memref.load %arg3[%c6_34] : memref<193xf32, #tpu.memory_space<smem>>
    %84 = vector.broadcast %83 : f32 to vector<8x128xf32>
    %85 = arith.mulf %82, %84 : vector<8x128xf32>
    %86 = arith.addf %80, %85 : vector<8x128xf32>
    %c2_35 = arith.constant 2 : index
    %c0_36 = arith.constant 0 : index
    %c0_37 = arith.constant 0 : index
    %87 = vector.load %arg1[%c2_35, %c0_36, %c0_37] : memref<12x8x128xf32, #tpu.memory_space<vmem>>, vector<1x8x128xf32>
    %88 = vector.shape_cast %87 : vector<1x8x128xf32> to vector<8x128xf32>
    %c11_38 = arith.constant 11 : index
    %89 = memref.load %arg3[%c11_38] : memref<193xf32, #tpu.memory_space<smem>>
    %90 = vector.broadcast %89 : f32 to vector<8x128xf32>
    %91 = arith.mulf %88, %90 : vector<8x128xf32>
    %92 = arith.addf %86, %91 : vector<8x128xf32>
    %c3_39 = arith.constant 3 : index
    %c0_40 = arith.constant 0 : index
    %c0_41 = arith.constant 0 : index
    %93 = vector.load %arg1[%c3_39, %c0_40, %c0_41] : memref<12x8x128xf32, #tpu.memory_space<vmem>>, vector<1x8x128xf32>
    %94 = vector.shape_cast %93 : vector<1x8x128xf32> to vector<8x128xf32>
    %c16 = arith.constant 16 : index
    %95 = memref.load %arg3[%c16] : memref<193xf32, #tpu.memory_space<smem>>
    %96 = vector.broadcast %95 : f32 to vector<8x128xf32>
    %97 = arith.mulf %94, %96 : vector<8x128xf32>
    %98 = arith.addf %92, %97 : vector<8x128xf32>
    %c4_42 = arith.constant 4 : index
    %c0_43 = arith.constant 0 : index
    %c0_44 = arith.constant 0 : index
    %99 = vector.load %arg1[%c4_42, %c0_43, %c0_44] : memref<12x8x128xf32, #tpu.memory_space<vmem>>, vector<1x8x128xf32>
    %100 = vector.shape_cast %99 : vector<1x8x128xf32> to vector<8x128xf32>
    %c21 = arith.constant 21 : index
    %101 = memref.load %arg3[%c21] : memref<193xf32, #tpu.memory_space<smem>>
    %102 = vector.broadcast %101 : f32 to vector<8x128xf32>
    %103 = arith.mulf %100, %102 : vector<8x128xf32>
    %104 = arith.addf %98, %103 : vector<8x128xf32>
    %c5_45 = arith.constant 5 : index
    %c0_46 = arith.constant 0 : index
    %c0_47 = arith.constant 0 : index
    %105 = vector.load %arg1[%c5_45, %c0_46, %c0_47] : memref<12x8x128xf32, #tpu.memory_space<vmem>>, vector<1x8x128xf32>
    %106 = vector.shape_cast %105 : vector<1x8x128xf32> to vector<8x128xf32>
    %c26 = arith.constant 26 : index
    %107 = memref.load %arg3[%c26] : memref<193xf32, #tpu.memory_space<smem>>
    %108 = vector.broadcast %107 : f32 to vector<8x128xf32>
    %109 = arith.mulf %106, %108 : vector<8x128xf32>
    %110 = arith.addf %104, %109 : vector<8x128xf32>
    %c6_48 = arith.constant 6 : index
    %c0_49 = arith.constant 0 : index
    %c0_50 = arith.constant 0 : index
    %111 = vector.load %arg1[%c6_48, %c0_49, %c0_50] : memref<12x8x128xf32, #tpu.memory_space<vmem>>, vector<1x8x128xf32>
    %112 = vector.shape_cast %111 : vector<1x8x128xf32> to vector<8x128xf32>
    %c31 = arith.constant 31 : index
    %113 = memref.load %arg3[%c31] : memref<193xf32, #tpu.memory_space<smem>>
    %114 = vector.broadcast %113 : f32 to vector<8x128xf32>
    %115 = arith.mulf %112, %114 : vector<8x128xf32>
    %116 = arith.addf %110, %115 : vector<8x128xf32>
    %c7_51 = arith.constant 7 : index
    %c0_52 = arith.constant 0 : index
    %c0_53 = arith.constant 0 : index
    %117 = vector.load %arg1[%c7_51, %c0_52, %c0_53] : memref<12x8x128xf32, #tpu.memory_space<vmem>>, vector<1x8x128xf32>
    %118 = vector.shape_cast %117 : vector<1x8x128xf32> to vector<8x128xf32>
    %c36 = arith.constant 36 : index
    %119 = memref.load %arg3[%c36] : memref<193xf32, #tpu.memory_space<smem>>
    %120 = vector.broadcast %119 : f32 to vector<8x128xf32>
    %121 = arith.mulf %118, %120 : vector<8x128xf32>
    %122 = arith.addf %116, %121 : vector<8x128xf32>
    %c8_54 = arith.constant 8 : index
    %c0_55 = arith.constant 0 : index
    %c0_56 = arith.constant 0 : index
    %123 = vector.load %arg1[%c8_54, %c0_55, %c0_56] : memref<12x8x128xf32, #tpu.memory_space<vmem>>, vector<1x8x128xf32>
    %124 = vector.shape_cast %123 : vector<1x8x128xf32> to vector<8x128xf32>
    %c41 = arith.constant 41 : index
    %125 = memref.load %arg3[%c41] : memref<193xf32, #tpu.memory_space<smem>>
    %126 = vector.broadcast %125 : f32 to vector<8x128xf32>
    %127 = arith.mulf %124, %126 : vector<8x128xf32>
    %128 = arith.addf %122, %127 : vector<8x128xf32>
    %c9_57 = arith.constant 9 : index
    %c0_58 = arith.constant 0 : index
    %c0_59 = arith.constant 0 : index
    %129 = vector.load %arg1[%c9_57, %c0_58, %c0_59] : memref<12x8x128xf32, #tpu.memory_space<vmem>>, vector<1x8x128xf32>
    %130 = vector.shape_cast %129 : vector<1x8x128xf32> to vector<8x128xf32>
    %c46 = arith.constant 46 : index
    %131 = memref.load %arg3[%c46] : memref<193xf32, #tpu.memory_space<smem>>
    %132 = vector.broadcast %131 : f32 to vector<8x128xf32>
    %133 = arith.mulf %130, %132 : vector<8x128xf32>
    %134 = arith.addf %128, %133 : vector<8x128xf32>
    %c10_60 = arith.constant 10 : index
    %c0_61 = arith.constant 0 : index
    %c0_62 = arith.constant 0 : index
    %135 = vector.load %arg1[%c10_60, %c0_61, %c0_62] : memref<12x8x128xf32, #tpu.memory_space<vmem>>, vector<1x8x128xf32>
    %136 = vector.shape_cast %135 : vector<1x8x128xf32> to vector<8x128xf32>
    %c51 = arith.constant 51 : index
    %137 = memref.load %arg3[%c51] : memref<193xf32, #tpu.memory_space<smem>>
    %138 = vector.broadcast %137 : f32 to vector<8x128xf32>
    %139 = arith.mulf %136, %138 : vector<8x128xf32>
    %140 = arith.addf %134, %139 : vector<8x128xf32>
    %c11_63 = arith.constant 11 : index
    %c0_64 = arith.constant 0 : index
    %c0_65 = arith.constant 0 : index
    %141 = vector.load %arg1[%c11_63, %c0_64, %c0_65] : memref<12x8x128xf32, #tpu.memory_space<vmem>>, vector<1x8x128xf32>
    %142 = vector.shape_cast %141 : vector<1x8x128xf32> to vector<8x128xf32>
    %c56 = arith.constant 56 : index
    %143 = memref.load %arg3[%c56] : memref<193xf32, #tpu.memory_space<smem>>
    %144 = vector.broadcast %143 : f32 to vector<8x128xf32>
    %145 = arith.mulf %142, %144 : vector<8x128xf32>
    %146 = arith.addf %140, %145 : vector<8x128xf32>
    %c61 = arith.constant 61 : index
    %147 = memref.load %arg3[%c61] : memref<193xf32, #tpu.memory_space<smem>>
    %148 = vector.broadcast %147 : f32 to vector<8x128xf32>
    %149 = arith.addf %146, %148 : vector<8x128xf32>
    %cst_66 = arith.constant 0.000000e+00 : f32
    %150 = vector.broadcast %cst_66 : f32 to vector<8x128xf32>
    %151 = arith.maximumf %149, %150 : vector<8x128xf32>
    %c0_67 = arith.constant 0 : index
    %c0_68 = arith.constant 0 : index
    %c0_69 = arith.constant 0 : index
    %152 = vector.load %arg1[%c0_67, %c0_68, %c0_69] : memref<12x8x128xf32, #tpu.memory_space<vmem>>, vector<1x8x128xf32>
    %153 = vector.shape_cast %152 : vector<1x8x128xf32> to vector<8x128xf32>
    %c2_70 = arith.constant 2 : index
    %154 = memref.load %arg3[%c2_70] : memref<193xf32, #tpu.memory_space<smem>>
    %155 = vector.broadcast %154 : f32 to vector<8x128xf32>
    %156 = arith.mulf %153, %155 : vector<8x128xf32>
    %c1_71 = arith.constant 1 : index
    %c0_72 = arith.constant 0 : index
    %c0_73 = arith.constant 0 : index
    %157 = vector.load %arg1[%c1_71, %c0_72, %c0_73] : memref<12x8x128xf32, #tpu.memory_space<vmem>>, vector<1x8x128xf32>
    %158 = vector.shape_cast %157 : vector<1x8x128xf32> to vector<8x128xf32>
    %c7_74 = arith.constant 7 : index
    %159 = memref.load %arg3[%c7_74] : memref<193xf32, #tpu.memory_space<smem>>
    %160 = vector.broadcast %159 : f32 to vector<8x128xf32>
    %161 = arith.mulf %158, %160 : vector<8x128xf32>
    %162 = arith.addf %156, %161 : vector<8x128xf32>
    %c2_75 = arith.constant 2 : index
    %c0_76 = arith.constant 0 : index
    %c0_77 = arith.constant 0 : index
    %163 = vector.load %arg1[%c2_75, %c0_76, %c0_77] : memref<12x8x128xf32, #tpu.memory_space<vmem>>, vector<1x8x128xf32>
    %164 = vector.shape_cast %163 : vector<1x8x128xf32> to vector<8x128xf32>
    %c12 = arith.constant 12 : index
    %165 = memref.load %arg3[%c12] : memref<193xf32, #tpu.memory_space<smem>>
    %166 = vector.broadcast %165 : f32 to vector<8x128xf32>
    %167 = arith.mulf %164, %166 : vector<8x128xf32>
    %168 = arith.addf %162, %167 : vector<8x128xf32>
    %c3_78 = arith.constant 3 : index
    %c0_79 = arith.constant 0 : index
    %c0_80 = arith.constant 0 : index
    %169 = vector.load %arg1[%c3_78, %c0_79, %c0_80] : memref<12x8x128xf32, #tpu.memory_space<vmem>>, vector<1x8x128xf32>
    %170 = vector.shape_cast %169 : vector<1x8x128xf32> to vector<8x128xf32>
    %c17 = arith.constant 17 : index
    %171 = memref.load %arg3[%c17] : memref<193xf32, #tpu.memory_space<smem>>
    %172 = vector.broadcast %171 : f32 to vector<8x128xf32>
    %173 = arith.mulf %170, %172 : vector<8x128xf32>
    %174 = arith.addf %168, %173 : vector<8x128xf32>
    %c4_81 = arith.constant 4 : index
    %c0_82 = arith.constant 0 : index
    %c0_83 = arith.constant 0 : index
    %175 = vector.load %arg1[%c4_81, %c0_82, %c0_83] : memref<12x8x128xf32, #tpu.memory_space<vmem>>, vector<1x8x128xf32>
    %176 = vector.shape_cast %175 : vector<1x8x128xf32> to vector<8x128xf32>
    %c22 = arith.constant 22 : index
    %177 = memref.load %arg3[%c22] : memref<193xf32, #tpu.memory_space<smem>>
    %178 = vector.broadcast %177 : f32 to vector<8x128xf32>
    %179 = arith.mulf %176, %178 : vector<8x128xf32>
    %180 = arith.addf %174, %179 : vector<8x128xf32>
    %c5_84 = arith.constant 5 : index
    %c0_85 = arith.constant 0 : index
    %c0_86 = arith.constant 0 : index
    %181 = vector.load %arg1[%c5_84, %c0_85, %c0_86] : memref<12x8x128xf32, #tpu.memory_space<vmem>>, vector<1x8x128xf32>
    %182 = vector.shape_cast %181 : vector<1x8x128xf32> to vector<8x128xf32>
    %c27 = arith.constant 27 : index
    %183 = memref.load %arg3[%c27] : memref<193xf32, #tpu.memory_space<smem>>
    %184 = vector.broadcast %183 : f32 to vector<8x128xf32>
    %185 = arith.mulf %182, %184 : vector<8x128xf32>
    %186 = arith.addf %180, %185 : vector<8x128xf32>
    %c6_87 = arith.constant 6 : index
    %c0_88 = arith.constant 0 : index
    %c0_89 = arith.constant 0 : index
    %187 = vector.load %arg1[%c6_87, %c0_88, %c0_89] : memref<12x8x128xf32, #tpu.memory_space<vmem>>, vector<1x8x128xf32>
    %188 = vector.shape_cast %187 : vector<1x8x128xf32> to vector<8x128xf32>
    %c32 = arith.constant 32 : index
    %189 = memref.load %arg3[%c32] : memref<193xf32, #tpu.memory_space<smem>>
    %190 = vector.broadcast %189 : f32 to vector<8x128xf32>
    %191 = arith.mulf %188, %190 : vector<8x128xf32>
    %192 = arith.addf %186, %191 : vector<8x128xf32>
    %c7_90 = arith.constant 7 : index
    %c0_91 = arith.constant 0 : index
    %c0_92 = arith.constant 0 : index
    %193 = vector.load %arg1[%c7_90, %c0_91, %c0_92] : memref<12x8x128xf32, #tpu.memory_space<vmem>>, vector<1x8x128xf32>
    %194 = vector.shape_cast %193 : vector<1x8x128xf32> to vector<8x128xf32>
    %c37 = arith.constant 37 : index
    %195 = memref.load %arg3[%c37] : memref<193xf32, #tpu.memory_space<smem>>
    %196 = vector.broadcast %195 : f32 to vector<8x128xf32>
    %197 = arith.mulf %194, %196 : vector<8x128xf32>
    %198 = arith.addf %192, %197 : vector<8x128xf32>
    %c8_93 = arith.constant 8 : index
    %c0_94 = arith.constant 0 : index
    %c0_95 = arith.constant 0 : index
    %199 = vector.load %arg1[%c8_93, %c0_94, %c0_95] : memref<12x8x128xf32, #tpu.memory_space<vmem>>, vector<1x8x128xf32>
    %200 = vector.shape_cast %199 : vector<1x8x128xf32> to vector<8x128xf32>
    %c42 = arith.constant 42 : index
    %201 = memref.load %arg3[%c42] : memref<193xf32, #tpu.memory_space<smem>>
    %202 = vector.broadcast %201 : f32 to vector<8x128xf32>
    %203 = arith.mulf %200, %202 : vector<8x128xf32>
    %204 = arith.addf %198, %203 : vector<8x128xf32>
    %c9_96 = arith.constant 9 : index
    %c0_97 = arith.constant 0 : index
    %c0_98 = arith.constant 0 : index
    %205 = vector.load %arg1[%c9_96, %c0_97, %c0_98] : memref<12x8x128xf32, #tpu.memory_space<vmem>>, vector<1x8x128xf32>
    %206 = vector.shape_cast %205 : vector<1x8x128xf32> to vector<8x128xf32>
    %c47 = arith.constant 47 : index
    %207 = memref.load %arg3[%c47] : memref<193xf32, #tpu.memory_space<smem>>
    %208 = vector.broadcast %207 : f32 to vector<8x128xf32>
    %209 = arith.mulf %206, %208 : vector<8x128xf32>
    %210 = arith.addf %204, %209 : vector<8x128xf32>
    %c10_99 = arith.constant 10 : index
    %c0_100 = arith.constant 0 : index
    %c0_101 = arith.constant 0 : index
    %211 = vector.load %arg1[%c10_99, %c0_100, %c0_101] : memref<12x8x128xf32, #tpu.memory_space<vmem>>, vector<1x8x128xf32>
    %212 = vector.shape_cast %211 : vector<1x8x128xf32> to vector<8x128xf32>
    %c52 = arith.constant 52 : index
    %213 = memref.load %arg3[%c52] : memref<193xf32, #tpu.memory_space<smem>>
    %214 = vector.broadcast %213 : f32 to vector<8x128xf32>
    %215 = arith.mulf %212, %214 : vector<8x128xf32>
    %216 = arith.addf %210, %215 : vector<8x128xf32>
    %c11_102 = arith.constant 11 : index
    %c0_103 = arith.constant 0 : index
    %c0_104 = arith.constant 0 : index
    %217 = vector.load %arg1[%c11_102, %c0_103, %c0_104] : memref<12x8x128xf32, #tpu.memory_space<vmem>>, vector<1x8x128xf32>
    %218 = vector.shape_cast %217 : vector<1x8x128xf32> to vector<8x128xf32>
    %c57 = arith.constant 57 : index
    %219 = memref.load %arg3[%c57] : memref<193xf32, #tpu.memory_space<smem>>
    %220 = vector.broadcast %219 : f32 to vector<8x128xf32>
    %221 = arith.mulf %218, %220 : vector<8x128xf32>
    %222 = arith.addf %216, %221 : vector<8x128xf32>
    %c62 = arith.constant 62 : index
    %223 = memref.load %arg3[%c62] : memref<193xf32, #tpu.memory_space<smem>>
    %224 = vector.broadcast %223 : f32 to vector<8x128xf32>
    %225 = arith.addf %222, %224 : vector<8x128xf32>
    %cst_105 = arith.constant 0.000000e+00 : f32
    %226 = vector.broadcast %cst_105 : f32 to vector<8x128xf32>
    %227 = arith.maximumf %225, %226 : vector<8x128xf32>
    %c0_106 = arith.constant 0 : index
    %c0_107 = arith.constant 0 : index
    %c0_108 = arith.constant 0 : index
    %228 = vector.load %arg1[%c0_106, %c0_107, %c0_108] : memref<12x8x128xf32, #tpu.memory_space<vmem>>, vector<1x8x128xf32>
    %229 = vector.shape_cast %228 : vector<1x8x128xf32> to vector<8x128xf32>
    %c3_109 = arith.constant 3 : index
    %230 = memref.load %arg3[%c3_109] : memref<193xf32, #tpu.memory_space<smem>>
    %231 = vector.broadcast %230 : f32 to vector<8x128xf32>
    %232 = arith.mulf %229, %231 : vector<8x128xf32>
    %c1_110 = arith.constant 1 : index
    %c0_111 = arith.constant 0 : index
    %c0_112 = arith.constant 0 : index
    %233 = vector.load %arg1[%c1_110, %c0_111, %c0_112] : memref<12x8x128xf32, #tpu.memory_space<vmem>>, vector<1x8x128xf32>
    %234 = vector.shape_cast %233 : vector<1x8x128xf32> to vector<8x128xf32>
    %c8_113 = arith.constant 8 : index
    %235 = memref.load %arg3[%c8_113] : memref<193xf32, #tpu.memory_space<smem>>
    %236 = vector.broadcast %235 : f32 to vector<8x128xf32>
    %237 = arith.mulf %234, %236 : vector<8x128xf32>
    %238 = arith.addf %232, %237 : vector<8x128xf32>
    %c2_114 = arith.constant 2 : index
    %c0_115 = arith.constant 0 : index
    %c0_116 = arith.constant 0 : index
    %239 = vector.load %arg1[%c2_114, %c0_115, %c0_116] : memref<12x8x128xf32, #tpu.memory_space<vmem>>, vector<1x8x128xf32>
    %240 = vector.shape_cast %239 : vector<1x8x128xf32> to vector<8x128xf32>
    %c13 = arith.constant 13 : index
    %241 = memref.load %arg3[%c13] : memref<193xf32, #tpu.memory_space<smem>>
    %242 = vector.broadcast %241 : f32 to vector<8x128xf32>
    %243 = arith.mulf %240, %242 : vector<8x128xf32>
    %244 = arith.addf %238, %243 : vector<8x128xf32>
    %c3_117 = arith.constant 3 : index
    %c0_118 = arith.constant 0 : index
    %c0_119 = arith.constant 0 : index
    %245 = vector.load %arg1[%c3_117, %c0_118, %c0_119] : memref<12x8x128xf32, #tpu.memory_space<vmem>>, vector<1x8x128xf32>
    %246 = vector.shape_cast %245 : vector<1x8x128xf32> to vector<8x128xf32>
    %c18 = arith.constant 18 : index
    %247 = memref.load %arg3[%c18] : memref<193xf32, #tpu.memory_space<smem>>
    %248 = vector.broadcast %247 : f32 to vector<8x128xf32>
    %249 = arith.mulf %246, %248 : vector<8x128xf32>
    %250 = arith.addf %244, %249 : vector<8x128xf32>
    %c4_120 = arith.constant 4 : index
    %c0_121 = arith.constant 0 : index
    %c0_122 = arith.constant 0 : index
    %251 = vector.load %arg1[%c4_120, %c0_121, %c0_122] : memref<12x8x128xf32, #tpu.memory_space<vmem>>, vector<1x8x128xf32>
    %252 = vector.shape_cast %251 : vector<1x8x128xf32> to vector<8x128xf32>
    %c23 = arith.constant 23 : index
    %253 = memref.load %arg3[%c23] : memref<193xf32, #tpu.memory_space<smem>>
    %254 = vector.broadcast %253 : f32 to vector<8x128xf32>
    %255 = arith.mulf %252, %254 : vector<8x128xf32>
    %256 = arith.addf %250, %255 : vector<8x128xf32>
    %c5_123 = arith.constant 5 : index
    %c0_124 = arith.constant 0 : index
    %c0_125 = arith.constant 0 : index
    %257 = vector.load %arg1[%c5_123, %c0_124, %c0_125] : memref<12x8x128xf32, #tpu.memory_space<vmem>>, vector<1x8x128xf32>
    %258 = vector.shape_cast %257 : vector<1x8x128xf32> to vector<8x128xf32>
    %c28 = arith.constant 28 : index
    %259 = memref.load %arg3[%c28] : memref<193xf32, #tpu.memory_space<smem>>
    %260 = vector.broadcast %259 : f32 to vector<8x128xf32>
    %261 = arith.mulf %258, %260 : vector<8x128xf32>
    %262 = arith.addf %256, %261 : vector<8x128xf32>
    %c6_126 = arith.constant 6 : index
    %c0_127 = arith.constant 0 : index
    %c0_128 = arith.constant 0 : index
    %263 = vector.load %arg1[%c6_126, %c0_127, %c0_128] : memref<12x8x128xf32, #tpu.memory_space<vmem>>, vector<1x8x128xf32>
    %264 = vector.shape_cast %263 : vector<1x8x128xf32> to vector<8x128xf32>
    %c33 = arith.constant 33 : index
    %265 = memref.load %arg3[%c33] : memref<193xf32, #tpu.memory_space<smem>>
    %266 = vector.broadcast %265 : f32 to vector<8x128xf32>
    %267 = arith.mulf %264, %266 : vector<8x128xf32>
    %268 = arith.addf %262, %267 : vector<8x128xf32>
    %c7_129 = arith.constant 7 : index
    %c0_130 = arith.constant 0 : index
    %c0_131 = arith.constant 0 : index
    %269 = vector.load %arg1[%c7_129, %c0_130, %c0_131] : memref<12x8x128xf32, #tpu.memory_space<vmem>>, vector<1x8x128xf32>
    %270 = vector.shape_cast %269 : vector<1x8x128xf32> to vector<8x128xf32>
    %c38 = arith.constant 38 : index
    %271 = memref.load %arg3[%c38] : memref<193xf32, #tpu.memory_space<smem>>
    %272 = vector.broadcast %271 : f32 to vector<8x128xf32>
    %273 = arith.mulf %270, %272 : vector<8x128xf32>
    %274 = arith.addf %268, %273 : vector<8x128xf32>
    %c8_132 = arith.constant 8 : index
    %c0_133 = arith.constant 0 : index
    %c0_134 = arith.constant 0 : index
    %275 = vector.load %arg1[%c8_132, %c0_133, %c0_134] : memref<12x8x128xf32, #tpu.memory_space<vmem>>, vector<1x8x128xf32>
    %276 = vector.shape_cast %275 : vector<1x8x128xf32> to vector<8x128xf32>
    %c43 = arith.constant 43 : index
    %277 = memref.load %arg3[%c43] : memref<193xf32, #tpu.memory_space<smem>>
    %278 = vector.broadcast %277 : f32 to vector<8x128xf32>
    %279 = arith.mulf %276, %278 : vector<8x128xf32>
    %280 = arith.addf %274, %279 : vector<8x128xf32>
    %c9_135 = arith.constant 9 : index
    %c0_136 = arith.constant 0 : index
    %c0_137 = arith.constant 0 : index
    %281 = vector.load %arg1[%c9_135, %c0_136, %c0_137] : memref<12x8x128xf32, #tpu.memory_space<vmem>>, vector<1x8x128xf32>
    %282 = vector.shape_cast %281 : vector<1x8x128xf32> to vector<8x128xf32>
    %c48 = arith.constant 48 : index
    %283 = memref.load %arg3[%c48] : memref<193xf32, #tpu.memory_space<smem>>
    %284 = vector.broadcast %283 : f32 to vector<8x128xf32>
    %285 = arith.mulf %282, %284 : vector<8x128xf32>
    %286 = arith.addf %280, %285 : vector<8x128xf32>
    %c10_138 = arith.constant 10 : index
    %c0_139 = arith.constant 0 : index
    %c0_140 = arith.constant 0 : index
    %287 = vector.load %arg1[%c10_138, %c0_139, %c0_140] : memref<12x8x128xf32, #tpu.memory_space<vmem>>, vector<1x8x128xf32>
    %288 = vector.shape_cast %287 : vector<1x8x128xf32> to vector<8x128xf32>
    %c53 = arith.constant 53 : index
    %289 = memref.load %arg3[%c53] : memref<193xf32, #tpu.memory_space<smem>>
    %290 = vector.broadcast %289 : f32 to vector<8x128xf32>
    %291 = arith.mulf %288, %290 : vector<8x128xf32>
    %292 = arith.addf %286, %291 : vector<8x128xf32>
    %c11_141 = arith.constant 11 : index
    %c0_142 = arith.constant 0 : index
    %c0_143 = arith.constant 0 : index
    %293 = vector.load %arg1[%c11_141, %c0_142, %c0_143] : memref<12x8x128xf32, #tpu.memory_space<vmem>>, vector<1x8x128xf32>
    %294 = vector.shape_cast %293 : vector<1x8x128xf32> to vector<8x128xf32>
    %c58 = arith.constant 58 : index
    %295 = memref.load %arg3[%c58] : memref<193xf32, #tpu.memory_space<smem>>
    %296 = vector.broadcast %295 : f32 to vector<8x128xf32>
    %297 = arith.mulf %294, %296 : vector<8x128xf32>
    %298 = arith.addf %292, %297 : vector<8x128xf32>
    %c63 = arith.constant 63 : index
    %299 = memref.load %arg3[%c63] : memref<193xf32, #tpu.memory_space<smem>>
    %300 = vector.broadcast %299 : f32 to vector<8x128xf32>
    %301 = arith.addf %298, %300 : vector<8x128xf32>
    %cst_144 = arith.constant 0.000000e+00 : f32
    %302 = vector.broadcast %cst_144 : f32 to vector<8x128xf32>
    %303 = arith.maximumf %301, %302 : vector<8x128xf32>
    %c0_145 = arith.constant 0 : index
    %c0_146 = arith.constant 0 : index
    %c0_147 = arith.constant 0 : index
    %304 = vector.load %arg1[%c0_145, %c0_146, %c0_147] : memref<12x8x128xf32, #tpu.memory_space<vmem>>, vector<1x8x128xf32>
    %305 = vector.shape_cast %304 : vector<1x8x128xf32> to vector<8x128xf32>
    %c4_148 = arith.constant 4 : index
    %306 = memref.load %arg3[%c4_148] : memref<193xf32, #tpu.memory_space<smem>>
    %307 = vector.broadcast %306 : f32 to vector<8x128xf32>
    %308 = arith.mulf %305, %307 : vector<8x128xf32>
    %c1_149 = arith.constant 1 : index
    %c0_150 = arith.constant 0 : index
    %c0_151 = arith.constant 0 : index
    %309 = vector.load %arg1[%c1_149, %c0_150, %c0_151] : memref<12x8x128xf32, #tpu.memory_space<vmem>>, vector<1x8x128xf32>
    %310 = vector.shape_cast %309 : vector<1x8x128xf32> to vector<8x128xf32>
    %c9_152 = arith.constant 9 : index
    %311 = memref.load %arg3[%c9_152] : memref<193xf32, #tpu.memory_space<smem>>
    %312 = vector.broadcast %311 : f32 to vector<8x128xf32>
    %313 = arith.mulf %310, %312 : vector<8x128xf32>
    %314 = arith.addf %308, %313 : vector<8x128xf32>
    %c2_153 = arith.constant 2 : index
    %c0_154 = arith.constant 0 : index
    %c0_155 = arith.constant 0 : index
    %315 = vector.load %arg1[%c2_153, %c0_154, %c0_155] : memref<12x8x128xf32, #tpu.memory_space<vmem>>, vector<1x8x128xf32>
    %316 = vector.shape_cast %315 : vector<1x8x128xf32> to vector<8x128xf32>
    %c14 = arith.constant 14 : index
    %317 = memref.load %arg3[%c14] : memref<193xf32, #tpu.memory_space<smem>>
    %318 = vector.broadcast %317 : f32 to vector<8x128xf32>
    %319 = arith.mulf %316, %318 : vector<8x128xf32>
    %320 = arith.addf %314, %319 : vector<8x128xf32>
    %c3_156 = arith.constant 3 : index
    %c0_157 = arith.constant 0 : index
    %c0_158 = arith.constant 0 : index
    %321 = vector.load %arg1[%c3_156, %c0_157, %c0_158] : memref<12x8x128xf32, #tpu.memory_space<vmem>>, vector<1x8x128xf32>
    %322 = vector.shape_cast %321 : vector<1x8x128xf32> to vector<8x128xf32>
    %c19 = arith.constant 19 : index
    %323 = memref.load %arg3[%c19] : memref<193xf32, #tpu.memory_space<smem>>
    %324 = vector.broadcast %323 : f32 to vector<8x128xf32>
    %325 = arith.mulf %322, %324 : vector<8x128xf32>
    %326 = arith.addf %320, %325 : vector<8x128xf32>
    %c4_159 = arith.constant 4 : index
    %c0_160 = arith.constant 0 : index
    %c0_161 = arith.constant 0 : index
    %327 = vector.load %arg1[%c4_159, %c0_160, %c0_161] : memref<12x8x128xf32, #tpu.memory_space<vmem>>, vector<1x8x128xf32>
    %328 = vector.shape_cast %327 : vector<1x8x128xf32> to vector<8x128xf32>
    %c24 = arith.constant 24 : index
    %329 = memref.load %arg3[%c24] : memref<193xf32, #tpu.memory_space<smem>>
    %330 = vector.broadcast %329 : f32 to vector<8x128xf32>
    %331 = arith.mulf %328, %330 : vector<8x128xf32>
    %332 = arith.addf %326, %331 : vector<8x128xf32>
    %c5_162 = arith.constant 5 : index
    %c0_163 = arith.constant 0 : index
    %c0_164 = arith.constant 0 : index
    %333 = vector.load %arg1[%c5_162, %c0_163, %c0_164] : memref<12x8x128xf32, #tpu.memory_space<vmem>>, vector<1x8x128xf32>
    %334 = vector.shape_cast %333 : vector<1x8x128xf32> to vector<8x128xf32>
    %c29 = arith.constant 29 : index
    %335 = memref.load %arg3[%c29] : memref<193xf32, #tpu.memory_space<smem>>
    %336 = vector.broadcast %335 : f32 to vector<8x128xf32>
    %337 = arith.mulf %334, %336 : vector<8x128xf32>
    %338 = arith.addf %332, %337 : vector<8x128xf32>
    %c6_165 = arith.constant 6 : index
    %c0_166 = arith.constant 0 : index
    %c0_167 = arith.constant 0 : index
    %339 = vector.load %arg1[%c6_165, %c0_166, %c0_167] : memref<12x8x128xf32, #tpu.memory_space<vmem>>, vector<1x8x128xf32>
    %340 = vector.shape_cast %339 : vector<1x8x128xf32> to vector<8x128xf32>
    %c34 = arith.constant 34 : index
    %341 = memref.load %arg3[%c34] : memref<193xf32, #tpu.memory_space<smem>>
    %342 = vector.broadcast %341 : f32 to vector<8x128xf32>
    %343 = arith.mulf %340, %342 : vector<8x128xf32>
    %344 = arith.addf %338, %343 : vector<8x128xf32>
    %c7_168 = arith.constant 7 : index
    %c0_169 = arith.constant 0 : index
    %c0_170 = arith.constant 0 : index
    %345 = vector.load %arg1[%c7_168, %c0_169, %c0_170] : memref<12x8x128xf32, #tpu.memory_space<vmem>>, vector<1x8x128xf32>
    %346 = vector.shape_cast %345 : vector<1x8x128xf32> to vector<8x128xf32>
    %c39 = arith.constant 39 : index
    %347 = memref.load %arg3[%c39] : memref<193xf32, #tpu.memory_space<smem>>
    %348 = vector.broadcast %347 : f32 to vector<8x128xf32>
    %349 = arith.mulf %346, %348 : vector<8x128xf32>
    %350 = arith.addf %344, %349 : vector<8x128xf32>
    %c8_171 = arith.constant 8 : index
    %c0_172 = arith.constant 0 : index
    %c0_173 = arith.constant 0 : index
    %351 = vector.load %arg1[%c8_171, %c0_172, %c0_173] : memref<12x8x128xf32, #tpu.memory_space<vmem>>, vector<1x8x128xf32>
    %352 = vector.shape_cast %351 : vector<1x8x128xf32> to vector<8x128xf32>
    %c44 = arith.constant 44 : index
    %353 = memref.load %arg3[%c44] : memref<193xf32, #tpu.memory_space<smem>>
    %354 = vector.broadcast %353 : f32 to vector<8x128xf32>
    %355 = arith.mulf %352, %354 : vector<8x128xf32>
    %356 = arith.addf %350, %355 : vector<8x128xf32>
    %c9_174 = arith.constant 9 : index
    %c0_175 = arith.constant 0 : index
    %c0_176 = arith.constant 0 : index
    %357 = vector.load %arg1[%c9_174, %c0_175, %c0_176] : memref<12x8x128xf32, #tpu.memory_space<vmem>>, vector<1x8x128xf32>
    %358 = vector.shape_cast %357 : vector<1x8x128xf32> to vector<8x128xf32>
    %c49 = arith.constant 49 : index
    %359 = memref.load %arg3[%c49] : memref<193xf32, #tpu.memory_space<smem>>
    %360 = vector.broadcast %359 : f32 to vector<8x128xf32>
    %361 = arith.mulf %358, %360 : vector<8x128xf32>
    %362 = arith.addf %356, %361 : vector<8x128xf32>
    %c10_177 = arith.constant 10 : index
    %c0_178 = arith.constant 0 : index
    %c0_179 = arith.constant 0 : index
    %363 = vector.load %arg1[%c10_177, %c0_178, %c0_179] : memref<12x8x128xf32, #tpu.memory_space<vmem>>, vector<1x8x128xf32>
    %364 = vector.shape_cast %363 : vector<1x8x128xf32> to vector<8x128xf32>
    %c54 = arith.constant 54 : index
    %365 = memref.load %arg3[%c54] : memref<193xf32, #tpu.memory_space<smem>>
    %366 = vector.broadcast %365 : f32 to vector<8x128xf32>
    %367 = arith.mulf %364, %366 : vector<8x128xf32>
    %368 = arith.addf %362, %367 : vector<8x128xf32>
    %c11_180 = arith.constant 11 : index
    %c0_181 = arith.constant 0 : index
    %c0_182 = arith.constant 0 : index
    %369 = vector.load %arg1[%c11_180, %c0_181, %c0_182] : memref<12x8x128xf32, #tpu.memory_space<vmem>>, vector<1x8x128xf32>
    %370 = vector.shape_cast %369 : vector<1x8x128xf32> to vector<8x128xf32>
    %c59 = arith.constant 59 : index
    %371 = memref.load %arg3[%c59] : memref<193xf32, #tpu.memory_space<smem>>
    %372 = vector.broadcast %371 : f32 to vector<8x128xf32>
    %373 = arith.mulf %370, %372 : vector<8x128xf32>
    %374 = arith.addf %368, %373 : vector<8x128xf32>
    %c64 = arith.constant 64 : index
    %375 = memref.load %arg3[%c64] : memref<193xf32, #tpu.memory_space<smem>>
    %376 = vector.broadcast %375 : f32 to vector<8x128xf32>
    %377 = arith.addf %374, %376 : vector<8x128xf32>
    %cst_183 = arith.constant 0.000000e+00 : f32
    %378 = vector.broadcast %cst_183 : f32 to vector<8x128xf32>
    %379 = arith.maximumf %377, %378 : vector<8x128xf32>
    %c65 = arith.constant 65 : index
    %380 = memref.load %arg3[%c65] : memref<193xf32, #tpu.memory_space<smem>>
    %381 = vector.broadcast %380 : f32 to vector<8x128xf32>
    %382 = arith.mulf %75, %381 : vector<8x128xf32>
    %c83 = arith.constant 83 : index
    %383 = memref.load %arg3[%c83] : memref<193xf32, #tpu.memory_space<smem>>
    %384 = vector.broadcast %383 : f32 to vector<8x128xf32>
    %385 = arith.mulf %75, %384 : vector<8x128xf32>
    %c68 = arith.constant 68 : index
    %386 = memref.load %arg3[%c68] : memref<193xf32, #tpu.memory_space<smem>>
    %387 = vector.broadcast %386 : f32 to vector<8x128xf32>
    %388 = arith.mulf %151, %387 : vector<8x128xf32>
    %389 = arith.addf %382, %388 : vector<8x128xf32>
    %c86 = arith.constant 86 : index
    %390 = memref.load %arg3[%c86] : memref<193xf32, #tpu.memory_space<smem>>
    %391 = vector.broadcast %390 : f32 to vector<8x128xf32>
    %392 = arith.mulf %151, %391 : vector<8x128xf32>
    %393 = arith.addf %385, %392 : vector<8x128xf32>
    %c71 = arith.constant 71 : index
    %394 = memref.load %arg3[%c71] : memref<193xf32, #tpu.memory_space<smem>>
    %395 = vector.broadcast %394 : f32 to vector<8x128xf32>
    %396 = arith.mulf %227, %395 : vector<8x128xf32>
    %397 = arith.addf %389, %396 : vector<8x128xf32>
    %c89 = arith.constant 89 : index
    %398 = memref.load %arg3[%c89] : memref<193xf32, #tpu.memory_space<smem>>
    %399 = vector.broadcast %398 : f32 to vector<8x128xf32>
    %400 = arith.mulf %227, %399 : vector<8x128xf32>
    %401 = arith.addf %393, %400 : vector<8x128xf32>
    %c74 = arith.constant 74 : index
    %402 = memref.load %arg3[%c74] : memref<193xf32, #tpu.memory_space<smem>>
    %403 = vector.broadcast %402 : f32 to vector<8x128xf32>
    %404 = arith.mulf %303, %403 : vector<8x128xf32>
    %405 = arith.addf %397, %404 : vector<8x128xf32>
    %c92 = arith.constant 92 : index
    %406 = memref.load %arg3[%c92] : memref<193xf32, #tpu.memory_space<smem>>
    %407 = vector.broadcast %406 : f32 to vector<8x128xf32>
    %408 = arith.mulf %303, %407 : vector<8x128xf32>
    %409 = arith.addf %401, %408 : vector<8x128xf32>
    %c77 = arith.constant 77 : index
    %410 = memref.load %arg3[%c77] : memref<193xf32, #tpu.memory_space<smem>>
    %411 = vector.broadcast %410 : f32 to vector<8x128xf32>
    %412 = arith.mulf %379, %411 : vector<8x128xf32>
    %413 = arith.addf %405, %412 : vector<8x128xf32>
    %c95 = arith.constant 95 : index
    %414 = memref.load %arg3[%c95] : memref<193xf32, #tpu.memory_space<smem>>
    %415 = vector.broadcast %414 : f32 to vector<8x128xf32>
    %416 = arith.mulf %379, %415 : vector<8x128xf32>
    %417 = arith.addf %409, %416 : vector<8x128xf32>
    %c80 = arith.constant 80 : index
    %418 = memref.load %arg3[%c80] : memref<193xf32, #tpu.memory_space<smem>>
    %419 = vector.broadcast %418 : f32 to vector<8x128xf32>
    %420 = arith.addf %413, %419 : vector<8x128xf32>
    %c98 = arith.constant 98 : index
    %421 = memref.load %arg3[%c98] : memref<193xf32, #tpu.memory_space<smem>>
    %422 = vector.broadcast %421 : f32 to vector<8x128xf32>
    %423 = arith.addf %417, %422 : vector<8x128xf32>
    %cst_184 = arith.constant 0.000000e+00 : f32
    %424 = vector.broadcast %cst_184 : f32 to vector<8x128xf32>
    %425 = arith.maximumf %423, %424 : vector<8x128xf32>
    %426 = math.absf %423 : vector<8x128xf32>
    %cst_185 = arith.constant 0.000000e+00 : f32
    %427 = vector.broadcast %cst_185 : f32 to vector<8x128xf32>
    %428 = arith.subf %427, %426 : vector<8x128xf32>
    %429 = math.exp %428 : vector<8x128xf32>
    %430 = math.log1p %429 : vector<8x128xf32>
    %431 = arith.addf %425, %430 : vector<8x128xf32>
    %c66 = arith.constant 66 : index
    %432 = memref.load %arg3[%c66] : memref<193xf32, #tpu.memory_space<smem>>
    %433 = vector.broadcast %432 : f32 to vector<8x128xf32>
    %434 = arith.mulf %75, %433 : vector<8x128xf32>
    %c84 = arith.constant 84 : index
    %435 = memref.load %arg3[%c84] : memref<193xf32, #tpu.memory_space<smem>>
    %436 = vector.broadcast %435 : f32 to vector<8x128xf32>
    %437 = arith.mulf %75, %436 : vector<8x128xf32>
    %c69 = arith.constant 69 : index
    %438 = memref.load %arg3[%c69] : memref<193xf32, #tpu.memory_space<smem>>
    %439 = vector.broadcast %438 : f32 to vector<8x128xf32>
    %440 = arith.mulf %151, %439 : vector<8x128xf32>
    %441 = arith.addf %434, %440 : vector<8x128xf32>
    %c87 = arith.constant 87 : index
    %442 = memref.load %arg3[%c87] : memref<193xf32, #tpu.memory_space<smem>>
    %443 = vector.broadcast %442 : f32 to vector<8x128xf32>
    %444 = arith.mulf %151, %443 : vector<8x128xf32>
    %445 = arith.addf %437, %444 : vector<8x128xf32>
    %c72 = arith.constant 72 : index
    %446 = memref.load %arg3[%c72] : memref<193xf32, #tpu.memory_space<smem>>
    %447 = vector.broadcast %446 : f32 to vector<8x128xf32>
    %448 = arith.mulf %227, %447 : vector<8x128xf32>
    %449 = arith.addf %441, %448 : vector<8x128xf32>
    %c90 = arith.constant 90 : index
    %450 = memref.load %arg3[%c90] : memref<193xf32, #tpu.memory_space<smem>>
    %451 = vector.broadcast %450 : f32 to vector<8x128xf32>
    %452 = arith.mulf %227, %451 : vector<8x128xf32>
    %453 = arith.addf %445, %452 : vector<8x128xf32>
    %c75 = arith.constant 75 : index
    %454 = memref.load %arg3[%c75] : memref<193xf32, #tpu.memory_space<smem>>
    %455 = vector.broadcast %454 : f32 to vector<8x128xf32>
    %456 = arith.mulf %303, %455 : vector<8x128xf32>
    %457 = arith.addf %449, %456 : vector<8x128xf32>
    %c93 = arith.constant 93 : index
    %458 = memref.load %arg3[%c93] : memref<193xf32, #tpu.memory_space<smem>>
    %459 = vector.broadcast %458 : f32 to vector<8x128xf32>
    %460 = arith.mulf %303, %459 : vector<8x128xf32>
    %461 = arith.addf %453, %460 : vector<8x128xf32>
    %c78 = arith.constant 78 : index
    %462 = memref.load %arg3[%c78] : memref<193xf32, #tpu.memory_space<smem>>
    %463 = vector.broadcast %462 : f32 to vector<8x128xf32>
    %464 = arith.mulf %379, %463 : vector<8x128xf32>
    %465 = arith.addf %457, %464 : vector<8x128xf32>
    %c96 = arith.constant 96 : index
    %466 = memref.load %arg3[%c96] : memref<193xf32, #tpu.memory_space<smem>>
    %467 = vector.broadcast %466 : f32 to vector<8x128xf32>
    %468 = arith.mulf %379, %467 : vector<8x128xf32>
    %469 = arith.addf %461, %468 : vector<8x128xf32>
    %c81 = arith.constant 81 : index
    %470 = memref.load %arg3[%c81] : memref<193xf32, #tpu.memory_space<smem>>
    %471 = vector.broadcast %470 : f32 to vector<8x128xf32>
    %472 = arith.addf %465, %471 : vector<8x128xf32>
    %c99 = arith.constant 99 : index
    %473 = memref.load %arg3[%c99] : memref<193xf32, #tpu.memory_space<smem>>
    %474 = vector.broadcast %473 : f32 to vector<8x128xf32>
    %475 = arith.addf %469, %474 : vector<8x128xf32>
    %cst_186 = arith.constant 0.000000e+00 : f32
    %476 = vector.broadcast %cst_186 : f32 to vector<8x128xf32>
    %477 = arith.maximumf %475, %476 : vector<8x128xf32>
    %478 = math.absf %475 : vector<8x128xf32>
    %cst_187 = arith.constant 0.000000e+00 : f32
    %479 = vector.broadcast %cst_187 : f32 to vector<8x128xf32>
    %480 = arith.subf %479, %478 : vector<8x128xf32>
    %481 = math.exp %480 : vector<8x128xf32>
    %482 = math.log1p %481 : vector<8x128xf32>
    %483 = arith.addf %477, %482 : vector<8x128xf32>
    %c67 = arith.constant 67 : index
    %484 = memref.load %arg3[%c67] : memref<193xf32, #tpu.memory_space<smem>>
    %485 = vector.broadcast %484 : f32 to vector<8x128xf32>
    %486 = arith.mulf %75, %485 : vector<8x128xf32>
    %c85 = arith.constant 85 : index
    %487 = memref.load %arg3[%c85] : memref<193xf32, #tpu.memory_space<smem>>
    %488 = vector.broadcast %487 : f32 to vector<8x128xf32>
    %489 = arith.mulf %75, %488 : vector<8x128xf32>
    %c70 = arith.constant 70 : index
    %490 = memref.load %arg3[%c70] : memref<193xf32, #tpu.memory_space<smem>>
    %491 = vector.broadcast %490 : f32 to vector<8x128xf32>
    %492 = arith.mulf %151, %491 : vector<8x128xf32>
    %493 = arith.addf %486, %492 : vector<8x128xf32>
    %c88 = arith.constant 88 : index
    %494 = memref.load %arg3[%c88] : memref<193xf32, #tpu.memory_space<smem>>
    %495 = vector.broadcast %494 : f32 to vector<8x128xf32>
    %496 = arith.mulf %151, %495 : vector<8x128xf32>
    %497 = arith.addf %489, %496 : vector<8x128xf32>
    %c73 = arith.constant 73 : index
    %498 = memref.load %arg3[%c73] : memref<193xf32, #tpu.memory_space<smem>>
    %499 = vector.broadcast %498 : f32 to vector<8x128xf32>
    %500 = arith.mulf %227, %499 : vector<8x128xf32>
    %501 = arith.addf %493, %500 : vector<8x128xf32>
    %c91 = arith.constant 91 : index
    %502 = memref.load %arg3[%c91] : memref<193xf32, #tpu.memory_space<smem>>
    %503 = vector.broadcast %502 : f32 to vector<8x128xf32>
    %504 = arith.mulf %227, %503 : vector<8x128xf32>
    %505 = arith.addf %497, %504 : vector<8x128xf32>
    %c76 = arith.constant 76 : index
    %506 = memref.load %arg3[%c76] : memref<193xf32, #tpu.memory_space<smem>>
    %507 = vector.broadcast %506 : f32 to vector<8x128xf32>
    %508 = arith.mulf %303, %507 : vector<8x128xf32>
    %509 = arith.addf %501, %508 : vector<8x128xf32>
    %c94 = arith.constant 94 : index
    %510 = memref.load %arg3[%c94] : memref<193xf32, #tpu.memory_space<smem>>
    %511 = vector.broadcast %510 : f32 to vector<8x128xf32>
    %512 = arith.mulf %303, %511 : vector<8x128xf32>
    %513 = arith.addf %505, %512 : vector<8x128xf32>
    %c79 = arith.constant 79 : index
    %514 = memref.load %arg3[%c79] : memref<193xf32, #tpu.memory_space<smem>>
    %515 = vector.broadcast %514 : f32 to vector<8x128xf32>
    %516 = arith.mulf %379, %515 : vector<8x128xf32>
    %517 = arith.addf %509, %516 : vector<8x128xf32>
    %c97 = arith.constant 97 : index
    %518 = memref.load %arg3[%c97] : memref<193xf32, #tpu.memory_space<smem>>
    %519 = vector.broadcast %518 : f32 to vector<8x128xf32>
    %520 = arith.mulf %379, %519 : vector<8x128xf32>
    %521 = arith.addf %513, %520 : vector<8x128xf32>
    %c82 = arith.constant 82 : index
    %522 = memref.load %arg3[%c82] : memref<193xf32, #tpu.memory_space<smem>>
    %523 = vector.broadcast %522 : f32 to vector<8x128xf32>
    %524 = arith.addf %517, %523 : vector<8x128xf32>
    %c100 = arith.constant 100 : index
    %525 = memref.load %arg3[%c100] : memref<193xf32, #tpu.memory_space<smem>>
    %526 = vector.broadcast %525 : f32 to vector<8x128xf32>
    %527 = arith.addf %521, %526 : vector<8x128xf32>
    %cst_188 = arith.constant 0.000000e+00 : f32
    %528 = vector.broadcast %cst_188 : f32 to vector<8x128xf32>
    %529 = arith.maximumf %527, %528 : vector<8x128xf32>
    %530 = math.absf %527 : vector<8x128xf32>
    %cst_189 = arith.constant 0.000000e+00 : f32
    %531 = vector.broadcast %cst_189 : f32 to vector<8x128xf32>
    %532 = arith.subf %531, %530 : vector<8x128xf32>
    %533 = math.exp %532 : vector<8x128xf32>
    %534 = math.log1p %533 : vector<8x128xf32>
    %535 = arith.addf %529, %534 : vector<8x128xf32>
    %c0_190 = arith.constant 0 : index
    %c0_191 = arith.constant 0 : index
    %c0_192 = arith.constant 0 : index
    %536 = vector.load %arg2[%c0_190, %c0_191, %c0_192] : memref<3x8x128xf32, #tpu.memory_space<vmem>>, vector<1x8x128xf32>
    %537 = vector.shape_cast %536 : vector<1x8x128xf32> to vector<8x128xf32>
    %538 = arith.mulf %537, %431 : vector<8x128xf32>
    %539 = arith.addf %420, %538 : vector<8x128xf32>
    %c1_193 = arith.constant 1 : index
    %c0_194 = arith.constant 0 : index
    %c0_195 = arith.constant 0 : index
    %540 = vector.load %arg2[%c1_193, %c0_194, %c0_195] : memref<3x8x128xf32, #tpu.memory_space<vmem>>, vector<1x8x128xf32>
    %541 = vector.shape_cast %540 : vector<1x8x128xf32> to vector<8x128xf32>
    %542 = arith.mulf %541, %483 : vector<8x128xf32>
    %543 = arith.addf %472, %542 : vector<8x128xf32>
    %c2_196 = arith.constant 2 : index
    %c0_197 = arith.constant 0 : index
    %c0_198 = arith.constant 0 : index
    %544 = vector.load %arg2[%c2_196, %c0_197, %c0_198] : memref<3x8x128xf32, #tpu.memory_space<vmem>>, vector<1x8x128xf32>
    %545 = vector.shape_cast %544 : vector<1x8x128xf32> to vector<8x128xf32>
    %546 = arith.mulf %545, %535 : vector<8x128xf32>
    %547 = arith.addf %524, %546 : vector<8x128xf32>
    %c101 = arith.constant 101 : index
    %548 = memref.load %arg3[%c101] : memref<193xf32, #tpu.memory_space<smem>>
    %549 = vector.broadcast %548 : f32 to vector<8x128xf32>
    %550 = arith.mulf %539, %549 : vector<8x128xf32>
    %c106 = arith.constant 106 : index
    %551 = memref.load %arg3[%c106] : memref<193xf32, #tpu.memory_space<smem>>
    %552 = vector.broadcast %551 : f32 to vector<8x128xf32>
    %553 = arith.mulf %543, %552 : vector<8x128xf32>
    %554 = arith.addf %550, %553 : vector<8x128xf32>
    %c111 = arith.constant 111 : index
    %555 = memref.load %arg3[%c111] : memref<193xf32, #tpu.memory_space<smem>>
    %556 = vector.broadcast %555 : f32 to vector<8x128xf32>
    %557 = arith.mulf %547, %556 : vector<8x128xf32>
    %558 = arith.addf %554, %557 : vector<8x128xf32>
    %c116 = arith.constant 116 : index
    %559 = memref.load %arg3[%c116] : memref<193xf32, #tpu.memory_space<smem>>
    %560 = vector.broadcast %559 : f32 to vector<8x128xf32>
    %561 = arith.addf %558, %560 : vector<8x128xf32>
    %cst_199 = arith.constant 0.000000e+00 : f32
    %562 = vector.broadcast %cst_199 : f32 to vector<8x128xf32>
    %563 = arith.maximumf %561, %562 : vector<8x128xf32>
    %c102 = arith.constant 102 : index
    %564 = memref.load %arg3[%c102] : memref<193xf32, #tpu.memory_space<smem>>
    %565 = vector.broadcast %564 : f32 to vector<8x128xf32>
    %566 = arith.mulf %539, %565 : vector<8x128xf32>
    %c107 = arith.constant 107 : index
    %567 = memref.load %arg3[%c107] : memref<193xf32, #tpu.memory_space<smem>>
    %568 = vector.broadcast %567 : f32 to vector<8x128xf32>
    %569 = arith.mulf %543, %568 : vector<8x128xf32>
    %570 = arith.addf %566, %569 : vector<8x128xf32>
    %c112 = arith.constant 112 : index
    %571 = memref.load %arg3[%c112] : memref<193xf32, #tpu.memory_space<smem>>
    %572 = vector.broadcast %571 : f32 to vector<8x128xf32>
    %573 = arith.mulf %547, %572 : vector<8x128xf32>
    %574 = arith.addf %570, %573 : vector<8x128xf32>
    %c117 = arith.constant 117 : index
    %575 = memref.load %arg3[%c117] : memref<193xf32, #tpu.memory_space<smem>>
    %576 = vector.broadcast %575 : f32 to vector<8x128xf32>
    %577 = arith.addf %574, %576 : vector<8x128xf32>
    %cst_200 = arith.constant 0.000000e+00 : f32
    %578 = vector.broadcast %cst_200 : f32 to vector<8x128xf32>
    %579 = arith.maximumf %577, %578 : vector<8x128xf32>
    %c103 = arith.constant 103 : index
    %580 = memref.load %arg3[%c103] : memref<193xf32, #tpu.memory_space<smem>>
    %581 = vector.broadcast %580 : f32 to vector<8x128xf32>
    %582 = arith.mulf %539, %581 : vector<8x128xf32>
    %c108 = arith.constant 108 : index
    %583 = memref.load %arg3[%c108] : memref<193xf32, #tpu.memory_space<smem>>
    %584 = vector.broadcast %583 : f32 to vector<8x128xf32>
    %585 = arith.mulf %543, %584 : vector<8x128xf32>
    %586 = arith.addf %582, %585 : vector<8x128xf32>
    %c113 = arith.constant 113 : index
    %587 = memref.load %arg3[%c113] : memref<193xf32, #tpu.memory_space<smem>>
    %588 = vector.broadcast %587 : f32 to vector<8x128xf32>
    %589 = arith.mulf %547, %588 : vector<8x128xf32>
    %590 = arith.addf %586, %589 : vector<8x128xf32>
    %c118 = arith.constant 118 : index
    %591 = memref.load %arg3[%c118] : memref<193xf32, #tpu.memory_space<smem>>
    %592 = vector.broadcast %591 : f32 to vector<8x128xf32>
    %593 = arith.addf %590, %592 : vector<8x128xf32>
    %cst_201 = arith.constant 0.000000e+00 : f32
    %594 = vector.broadcast %cst_201 : f32 to vector<8x128xf32>
    %595 = arith.maximumf %593, %594 : vector<8x128xf32>
    %c104 = arith.constant 104 : index
    %596 = memref.load %arg3[%c104] : memref<193xf32, #tpu.memory_space<smem>>
    %597 = vector.broadcast %596 : f32 to vector<8x128xf32>
    %598 = arith.mulf %539, %597 : vector<8x128xf32>
    %c109 = arith.constant 109 : index
    %599 = memref.load %arg3[%c109] : memref<193xf32, #tpu.memory_space<smem>>
    %600 = vector.broadcast %599 : f32 to vector<8x128xf32>
    %601 = arith.mulf %543, %600 : vector<8x128xf32>
    %602 = arith.addf %598, %601 : vector<8x128xf32>
    %c114 = arith.constant 114 : index
    %603 = memref.load %arg3[%c114] : memref<193xf32, #tpu.memory_space<smem>>
    %604 = vector.broadcast %603 : f32 to vector<8x128xf32>
    %605 = arith.mulf %547, %604 : vector<8x128xf32>
    %606 = arith.addf %602, %605 : vector<8x128xf32>
    %c119 = arith.constant 119 : index
    %607 = memref.load %arg3[%c119] : memref<193xf32, #tpu.memory_space<smem>>
    %608 = vector.broadcast %607 : f32 to vector<8x128xf32>
    %609 = arith.addf %606, %608 : vector<8x128xf32>
    %cst_202 = arith.constant 0.000000e+00 : f32
    %610 = vector.broadcast %cst_202 : f32 to vector<8x128xf32>
    %611 = arith.maximumf %609, %610 : vector<8x128xf32>
    %c105 = arith.constant 105 : index
    %612 = memref.load %arg3[%c105] : memref<193xf32, #tpu.memory_space<smem>>
    %613 = vector.broadcast %612 : f32 to vector<8x128xf32>
    %614 = arith.mulf %539, %613 : vector<8x128xf32>
    %c110 = arith.constant 110 : index
    %615 = memref.load %arg3[%c110] : memref<193xf32, #tpu.memory_space<smem>>
    %616 = vector.broadcast %615 : f32 to vector<8x128xf32>
    %617 = arith.mulf %543, %616 : vector<8x128xf32>
    %618 = arith.addf %614, %617 : vector<8x128xf32>
    %c115 = arith.constant 115 : index
    %619 = memref.load %arg3[%c115] : memref<193xf32, #tpu.memory_space<smem>>
    %620 = vector.broadcast %619 : f32 to vector<8x128xf32>
    %621 = arith.mulf %547, %620 : vector<8x128xf32>
    %622 = arith.addf %618, %621 : vector<8x128xf32>
    %c120 = arith.constant 120 : index
    %623 = memref.load %arg3[%c120] : memref<193xf32, #tpu.memory_space<smem>>
    %624 = vector.broadcast %623 : f32 to vector<8x128xf32>
    %625 = arith.addf %622, %624 : vector<8x128xf32>
    %cst_203 = arith.constant 0.000000e+00 : f32
    %626 = vector.broadcast %cst_203 : f32 to vector<8x128xf32>
    %627 = arith.maximumf %625, %626 : vector<8x128xf32>
    %c121 = arith.constant 121 : index
    %628 = memref.load %arg3[%c121] : memref<193xf32, #tpu.memory_space<smem>>
    %629 = vector.broadcast %628 : f32 to vector<8x128xf32>
    %630 = arith.mulf %563, %629 : vector<8x128xf32>
    %c133 = arith.constant 133 : index
    %631 = memref.load %arg3[%c133] : memref<193xf32, #tpu.memory_space<smem>>
    %632 = vector.broadcast %631 : f32 to vector<8x128xf32>
    %633 = arith.mulf %579, %632 : vector<8x128xf32>
    %634 = arith.addf %630, %633 : vector<8x128xf32>
    %c145 = arith.constant 145 : index
    %635 = memref.load %arg3[%c145] : memref<193xf32, #tpu.memory_space<smem>>
    %636 = vector.broadcast %635 : f32 to vector<8x128xf32>
    %637 = arith.mulf %595, %636 : vector<8x128xf32>
    %638 = arith.addf %634, %637 : vector<8x128xf32>
    %c157 = arith.constant 157 : index
    %639 = memref.load %arg3[%c157] : memref<193xf32, #tpu.memory_space<smem>>
    %640 = vector.broadcast %639 : f32 to vector<8x128xf32>
    %641 = arith.mulf %611, %640 : vector<8x128xf32>
    %642 = arith.addf %638, %641 : vector<8x128xf32>
    %c169 = arith.constant 169 : index
    %643 = memref.load %arg3[%c169] : memref<193xf32, #tpu.memory_space<smem>>
    %644 = vector.broadcast %643 : f32 to vector<8x128xf32>
    %645 = arith.mulf %627, %644 : vector<8x128xf32>
    %646 = arith.addf %642, %645 : vector<8x128xf32>
    %c181 = arith.constant 181 : index
    %647 = memref.load %arg3[%c181] : memref<193xf32, #tpu.memory_space<smem>>
    %648 = vector.broadcast %647 : f32 to vector<8x128xf32>
    %649 = arith.addf %646, %648 : vector<8x128xf32>
    %650 = arith.negf %649 : vector<8x128xf32>
    %651 = math.exp %650 : vector<8x128xf32>
    %cst_204 = arith.constant 1.000000e+00 : f32
    %652 = vector.broadcast %cst_204 : f32 to vector<8x128xf32>
    %653 = arith.addf %652, %651 : vector<8x128xf32>
    %654 = arith.divf %652, %653 : vector<8x128xf32>
    %c0_205 = arith.constant 0 : index
    %c0_206 = arith.constant 0 : index
    %c0_207 = arith.constant 0 : index
    %655 = vector.load %arg4[%c0_205, %c0_206, %c0_207] : memref<18x8x128xf32, #tpu.memory_space<vmem>>, vector<1x8x128xf32>
    %656 = vector.shape_cast %655 : vector<1x8x128xf32> to vector<8x128xf32>
    %657 = vector.shape_cast %654 : vector<8x128xf32> to vector<1x8x128xf32>
    tpu.vector_store %arg4[%c0_205, %c0_206, %c0_207], %657 {strides = array<i32>} : memref<18x8x128xf32, #tpu.memory_space<vmem>>, vector<1x8x128xf32>,
    %c122 = arith.constant 122 : index
    %658 = memref.load %arg3[%c122] : memref<193xf32, #tpu.memory_space<smem>>
    %659 = vector.broadcast %658 : f32 to vector<8x128xf32>
    %660 = arith.mulf %563, %659 : vector<8x128xf32>
    %c134 = arith.constant 134 : index
    %661 = memref.load %arg3[%c134] : memref<193xf32, #tpu.memory_space<smem>>
    %662 = vector.broadcast %661 : f32 to vector<8x128xf32>
    %663 = arith.mulf %579, %662 : vector<8x128xf32>
    %664 = arith.addf %660, %663 : vector<8x128xf32>
    %c146 = arith.constant 146 : index
    %665 = memref.load %arg3[%c146] : memref<193xf32, #tpu.memory_space<smem>>
    %666 = vector.broadcast %665 : f32 to vector<8x128xf32>
    %667 = arith.mulf %595, %666 : vector<8x128xf32>
    %668 = arith.addf %664, %667 : vector<8x128xf32>
    %c158 = arith.constant 158 : index
    %669 = memref.load %arg3[%c158] : memref<193xf32, #tpu.memory_space<smem>>
    %670 = vector.broadcast %669 : f32 to vector<8x128xf32>
    %671 = arith.mulf %611, %670 : vector<8x128xf32>
    %672 = arith.addf %668, %671 : vector<8x128xf32>
    %c170 = arith.constant 170 : index
    %673 = memref.load %arg3[%c170] : memref<193xf32, #tpu.memory_space<smem>>
    %674 = vector.broadcast %673 : f32 to vector<8x128xf32>
    %675 = arith.mulf %627, %674 : vector<8x128xf32>
    %676 = arith.addf %672, %675 : vector<8x128xf32>
    %c182 = arith.constant 182 : index
    %677 = memref.load %arg3[%c182] : memref<193xf32, #tpu.memory_space<smem>>
    %678 = vector.broadcast %677 : f32 to vector<8x128xf32>
    %679 = arith.addf %676, %678 : vector<8x128xf32>
    %680 = arith.negf %679 : vector<8x128xf32>
    %681 = math.exp %680 : vector<8x128xf32>
    %cst_208 = arith.constant 1.000000e+00 : f32
    %682 = vector.broadcast %cst_208 : f32 to vector<8x128xf32>
    %683 = arith.addf %682, %681 : vector<8x128xf32>
    %684 = arith.divf %682, %683 : vector<8x128xf32>
    %c1_209 = arith.constant 1 : index
    %c0_210 = arith.constant 0 : index
    %c0_211 = arith.constant 0 : index
    %685 = vector.load %arg4[%c1_209, %c0_210, %c0_211] : memref<18x8x128xf32, #tpu.memory_space<vmem>>, vector<1x8x128xf32>
    %686 = vector.shape_cast %685 : vector<1x8x128xf32> to vector<8x128xf32>
    %687 = vector.shape_cast %684 : vector<8x128xf32> to vector<1x8x128xf32>
    tpu.vector_store %arg4[%c1_209, %c0_210, %c0_211], %687 {strides = array<i32>} : memref<18x8x128xf32, #tpu.memory_space<vmem>>, vector<1x8x128xf32>,
    %c123 = arith.constant 123 : index
    %688 = memref.load %arg3[%c123] : memref<193xf32, #tpu.memory_space<smem>>
    %689 = vector.broadcast %688 : f32 to vector<8x128xf32>
    %690 = arith.mulf %563, %689 : vector<8x128xf32>
    %c135 = arith.constant 135 : index
    %691 = memref.load %arg3[%c135] : memref<193xf32, #tpu.memory_space<smem>>
    %692 = vector.broadcast %691 : f32 to vector<8x128xf32>
    %693 = arith.mulf %579, %692 : vector<8x128xf32>
    %694 = arith.addf %690, %693 : vector<8x128xf32>
    %c147 = arith.constant 147 : index
    %695 = memref.load %arg3[%c147] : memref<193xf32, #tpu.memory_space<smem>>
    %696 = vector.broadcast %695 : f32 to vector<8x128xf32>
    %697 = arith.mulf %595, %696 : vector<8x128xf32>
    %698 = arith.addf %694, %697 : vector<8x128xf32>
    %c159 = arith.constant 159 : index
    %699 = memref.load %arg3[%c159] : memref<193xf32, #tpu.memory_space<smem>>
    %700 = vector.broadcast %699 : f32 to vector<8x128xf32>
    %701 = arith.mulf %611, %700 : vector<8x128xf32>
    %702 = arith.addf %698, %701 : vector<8x128xf32>
    %c171 = arith.constant 171 : index
    %703 = memref.load %arg3[%c171] : memref<193xf32, #tpu.memory_space<smem>>
    %704 = vector.broadcast %703 : f32 to vector<8x128xf32>
    %705 = arith.mulf %627, %704 : vector<8x128xf32>
    %706 = arith.addf %702, %705 : vector<8x128xf32>
    %c183 = arith.constant 183 : index
    %707 = memref.load %arg3[%c183] : memref<193xf32, #tpu.memory_space<smem>>
    %708 = vector.broadcast %707 : f32 to vector<8x128xf32>
    %709 = arith.addf %706, %708 : vector<8x128xf32>
    %710 = arith.negf %709 : vector<8x128xf32>
    %711 = math.exp %710 : vector<8x128xf32>
    %cst_212 = arith.constant 1.000000e+00 : f32
    %712 = vector.broadcast %cst_212 : f32 to vector<8x128xf32>
    %713 = arith.addf %712, %711 : vector<8x128xf32>
    %714 = arith.divf %712, %713 : vector<8x128xf32>
    %c2_213 = arith.constant 2 : index
    %c0_214 = arith.constant 0 : index
    %c0_215 = arith.constant 0 : index
    %715 = vector.load %arg4[%c2_213, %c0_214, %c0_215] : memref<18x8x128xf32, #tpu.memory_space<vmem>>, vector<1x8x128xf32>
    %716 = vector.shape_cast %715 : vector<1x8x128xf32> to vector<8x128xf32>
    %717 = vector.shape_cast %714 : vector<8x128xf32> to vector<1x8x128xf32>
    tpu.vector_store %arg4[%c2_213, %c0_214, %c0_215], %717 {strides = array<i32>} : memref<18x8x128xf32, #tpu.memory_space<vmem>>, vector<1x8x128xf32>,
    %c124 = arith.constant 124 : index
    %718 = memref.load %arg3[%c124] : memref<193xf32, #tpu.memory_space<smem>>
    %719 = vector.broadcast %718 : f32 to vector<8x128xf32>
    %720 = arith.mulf %563, %719 : vector<8x128xf32>
    %c136 = arith.constant 136 : index
    %721 = memref.load %arg3[%c136] : memref<193xf32, #tpu.memory_space<smem>>
    %722 = vector.broadcast %721 : f32 to vector<8x128xf32>
    %723 = arith.mulf %579, %722 : vector<8x128xf32>
    %724 = arith.addf %720, %723 : vector<8x128xf32>
    %c148 = arith.constant 148 : index
    %725 = memref.load %arg3[%c148] : memref<193xf32, #tpu.memory_space<smem>>
    %726 = vector.broadcast %725 : f32 to vector<8x128xf32>
    %727 = arith.mulf %595, %726 : vector<8x128xf32>
    %728 = arith.addf %724, %727 : vector<8x128xf32>
    %c160 = arith.constant 160 : index
    %729 = memref.load %arg3[%c160] : memref<193xf32, #tpu.memory_space<smem>>
    %730 = vector.broadcast %729 : f32 to vector<8x128xf32>
    %731 = arith.mulf %611, %730 : vector<8x128xf32>
    %732 = arith.addf %728, %731 : vector<8x128xf32>
    %c172 = arith.constant 172 : index
    %733 = memref.load %arg3[%c172] : memref<193xf32, #tpu.memory_space<smem>>
    %734 = vector.broadcast %733 : f32 to vector<8x128xf32>
    %735 = arith.mulf %627, %734 : vector<8x128xf32>
    %736 = arith.addf %732, %735 : vector<8x128xf32>
    %c184 = arith.constant 184 : index
    %737 = memref.load %arg3[%c184] : memref<193xf32, #tpu.memory_space<smem>>
    %738 = vector.broadcast %737 : f32 to vector<8x128xf32>
    %739 = arith.addf %736, %738 : vector<8x128xf32>
    %740 = arith.negf %739 : vector<8x128xf32>
    %741 = math.exp %740 : vector<8x128xf32>
    %cst_216 = arith.constant 1.000000e+00 : f32
    %742 = vector.broadcast %cst_216 : f32 to vector<8x128xf32>
    %743 = arith.addf %742, %741 : vector<8x128xf32>
    %744 = arith.divf %742, %743 : vector<8x128xf32>
    %c3_217 = arith.constant 3 : index
    %c0_218 = arith.constant 0 : index
    %c0_219 = arith.constant 0 : index
    %745 = vector.load %arg4[%c3_217, %c0_218, %c0_219] : memref<18x8x128xf32, #tpu.memory_space<vmem>>, vector<1x8x128xf32>
    %746 = vector.shape_cast %745 : vector<1x8x128xf32> to vector<8x128xf32>
    %747 = vector.shape_cast %744 : vector<8x128xf32> to vector<1x8x128xf32>
    tpu.vector_store %arg4[%c3_217, %c0_218, %c0_219], %747 {strides = array<i32>} : memref<18x8x128xf32, #tpu.memory_space<vmem>>, vector<1x8x128xf32>,
    %c125 = arith.constant 125 : index
    %748 = memref.load %arg3[%c125] : memref<193xf32, #tpu.memory_space<smem>>
    %749 = vector.broadcast %748 : f32 to vector<8x128xf32>
    %750 = arith.mulf %563, %749 : vector<8x128xf32>
    %c137 = arith.constant 137 : index
    %751 = memref.load %arg3[%c137] : memref<193xf32, #tpu.memory_space<smem>>
    %752 = vector.broadcast %751 : f32 to vector<8x128xf32>
    %753 = arith.mulf %579, %752 : vector<8x128xf32>
    %754 = arith.addf %750, %753 : vector<8x128xf32>
    %c149 = arith.constant 149 : index
    %755 = memref.load %arg3[%c149] : memref<193xf32, #tpu.memory_space<smem>>
    %756 = vector.broadcast %755 : f32 to vector<8x128xf32>
    %757 = arith.mulf %595, %756 : vector<8x128xf32>
    %758 = arith.addf %754, %757 : vector<8x128xf32>
    %c161 = arith.constant 161 : index
    %759 = memref.load %arg3[%c161] : memref<193xf32, #tpu.memory_space<smem>>
    %760 = vector.broadcast %759 : f32 to vector<8x128xf32>
    %761 = arith.mulf %611, %760 : vector<8x128xf32>
    %762 = arith.addf %758, %761 : vector<8x128xf32>
    %c173 = arith.constant 173 : index
    %763 = memref.load %arg3[%c173] : memref<193xf32, #tpu.memory_space<smem>>
    %764 = vector.broadcast %763 : f32 to vector<8x128xf32>
    %765 = arith.mulf %627, %764 : vector<8x128xf32>
    %766 = arith.addf %762, %765 : vector<8x128xf32>
    %c185 = arith.constant 185 : index
    %767 = memref.load %arg3[%c185] : memref<193xf32, #tpu.memory_space<smem>>
    %768 = vector.broadcast %767 : f32 to vector<8x128xf32>
    %769 = arith.addf %766, %768 : vector<8x128xf32>
    %770 = arith.negf %769 : vector<8x128xf32>
    %771 = math.exp %770 : vector<8x128xf32>
    %cst_220 = arith.constant 1.000000e+00 : f32
    %772 = vector.broadcast %cst_220 : f32 to vector<8x128xf32>
    %773 = arith.addf %772, %771 : vector<8x128xf32>
    %774 = arith.divf %772, %773 : vector<8x128xf32>
    %c4_221 = arith.constant 4 : index
    %c0_222 = arith.constant 0 : index
    %c0_223 = arith.constant 0 : index
    %775 = vector.load %arg4[%c4_221, %c0_222, %c0_223] : memref<18x8x128xf32, #tpu.memory_space<vmem>>, vector<1x8x128xf32>
    %776 = vector.shape_cast %775 : vector<1x8x128xf32> to vector<8x128xf32>
    %777 = vector.shape_cast %774 : vector<8x128xf32> to vector<1x8x128xf32>
    tpu.vector_store %arg4[%c4_221, %c0_222, %c0_223], %777 {strides = array<i32>} : memref<18x8x128xf32, #tpu.memory_space<vmem>>, vector<1x8x128xf32>,
    %c126 = arith.constant 126 : index
    %778 = memref.load %arg3[%c126] : memref<193xf32, #tpu.memory_space<smem>>
    %779 = vector.broadcast %778 : f32 to vector<8x128xf32>
    %780 = arith.mulf %563, %779 : vector<8x128xf32>
    %c138 = arith.constant 138 : index
    %781 = memref.load %arg3[%c138] : memref<193xf32, #tpu.memory_space<smem>>
    %782 = vector.broadcast %781 : f32 to vector<8x128xf32>
    %783 = arith.mulf %579, %782 : vector<8x128xf32>
    %784 = arith.addf %780, %783 : vector<8x128xf32>
    %c150 = arith.constant 150 : index
    %785 = memref.load %arg3[%c150] : memref<193xf32, #tpu.memory_space<smem>>
    %786 = vector.broadcast %785 : f32 to vector<8x128xf32>
    %787 = arith.mulf %595, %786 : vector<8x128xf32>
    %788 = arith.addf %784, %787 : vector<8x128xf32>
    %c162 = arith.constant 162 : index
    %789 = memref.load %arg3[%c162] : memref<193xf32, #tpu.memory_space<smem>>
    %790 = vector.broadcast %789 : f32 to vector<8x128xf32>
    %791 = arith.mulf %611, %790 : vector<8x128xf32>
    %792 = arith.addf %788, %791 : vector<8x128xf32>
    %c174 = arith.constant 174 : index
    %793 = memref.load %arg3[%c174] : memref<193xf32, #tpu.memory_space<smem>>
    %794 = vector.broadcast %793 : f32 to vector<8x128xf32>
    %795 = arith.mulf %627, %794 : vector<8x128xf32>
    %796 = arith.addf %792, %795 : vector<8x128xf32>
    %c186 = arith.constant 186 : index
    %797 = memref.load %arg3[%c186] : memref<193xf32, #tpu.memory_space<smem>>
    %798 = vector.broadcast %797 : f32 to vector<8x128xf32>
    %799 = arith.addf %796, %798 : vector<8x128xf32>
    %800 = arith.negf %799 : vector<8x128xf32>
    %801 = math.exp %800 : vector<8x128xf32>
    %cst_224 = arith.constant 1.000000e+00 : f32
    %802 = vector.broadcast %cst_224 : f32 to vector<8x128xf32>
    %803 = arith.addf %802, %801 : vector<8x128xf32>
    %804 = arith.divf %802, %803 : vector<8x128xf32>
    %c5_225 = arith.constant 5 : index
    %c0_226 = arith.constant 0 : index
    %c0_227 = arith.constant 0 : index
    %805 = vector.load %arg4[%c5_225, %c0_226, %c0_227] : memref<18x8x128xf32, #tpu.memory_space<vmem>>, vector<1x8x128xf32>
    %806 = vector.shape_cast %805 : vector<1x8x128xf32> to vector<8x128xf32>
    %807 = vector.shape_cast %804 : vector<8x128xf32> to vector<1x8x128xf32>
    tpu.vector_store %arg4[%c5_225, %c0_226, %c0_227], %807 {strides = array<i32>} : memref<18x8x128xf32, #tpu.memory_space<vmem>>, vector<1x8x128xf32>,
    %c127 = arith.constant 127 : index
    %808 = memref.load %arg3[%c127] : memref<193xf32, #tpu.memory_space<smem>>
    %809 = vector.broadcast %808 : f32 to vector<8x128xf32>
    %810 = arith.mulf %563, %809 : vector<8x128xf32>
    %c139 = arith.constant 139 : index
    %811 = memref.load %arg3[%c139] : memref<193xf32, #tpu.memory_space<smem>>
    %812 = vector.broadcast %811 : f32 to vector<8x128xf32>
    %813 = arith.mulf %579, %812 : vector<8x128xf32>
    %814 = arith.addf %810, %813 : vector<8x128xf32>
    %c151 = arith.constant 151 : index
    %815 = memref.load %arg3[%c151] : memref<193xf32, #tpu.memory_space<smem>>
    %816 = vector.broadcast %815 : f32 to vector<8x128xf32>
    %817 = arith.mulf %595, %816 : vector<8x128xf32>
    %818 = arith.addf %814, %817 : vector<8x128xf32>
    %c163 = arith.constant 163 : index
    %819 = memref.load %arg3[%c163] : memref<193xf32, #tpu.memory_space<smem>>
    %820 = vector.broadcast %819 : f32 to vector<8x128xf32>
    %821 = arith.mulf %611, %820 : vector<8x128xf32>
    %822 = arith.addf %818, %821 : vector<8x128xf32>
    %c175 = arith.constant 175 : index
    %823 = memref.load %arg3[%c175] : memref<193xf32, #tpu.memory_space<smem>>
    %824 = vector.broadcast %823 : f32 to vector<8x128xf32>
    %825 = arith.mulf %627, %824 : vector<8x128xf32>
    %826 = arith.addf %822, %825 : vector<8x128xf32>
    %c187 = arith.constant 187 : index
    %827 = memref.load %arg3[%c187] : memref<193xf32, #tpu.memory_space<smem>>
    %828 = vector.broadcast %827 : f32 to vector<8x128xf32>
    %829 = arith.addf %826, %828 : vector<8x128xf32>
    %830 = arith.negf %829 : vector<8x128xf32>
    %831 = math.exp %830 : vector<8x128xf32>
    %cst_228 = arith.constant 1.000000e+00 : f32
    %832 = vector.broadcast %cst_228 : f32 to vector<8x128xf32>
    %833 = arith.addf %832, %831 : vector<8x128xf32>
    %834 = arith.divf %832, %833 : vector<8x128xf32>
    %c6_229 = arith.constant 6 : index
    %c0_230 = arith.constant 0 : index
    %c0_231 = arith.constant 0 : index
    %835 = vector.load %arg4[%c6_229, %c0_230, %c0_231] : memref<18x8x128xf32, #tpu.memory_space<vmem>>, vector<1x8x128xf32>
    %836 = vector.shape_cast %835 : vector<1x8x128xf32> to vector<8x128xf32>
    %837 = vector.shape_cast %834 : vector<8x128xf32> to vector<1x8x128xf32>
    tpu.vector_store %arg4[%c6_229, %c0_230, %c0_231], %837 {strides = array<i32>} : memref<18x8x128xf32, #tpu.memory_space<vmem>>, vector<1x8x128xf32>,
    %c128 = arith.constant 128 : index
    %838 = memref.load %arg3[%c128] : memref<193xf32, #tpu.memory_space<smem>>
    %839 = vector.broadcast %838 : f32 to vector<8x128xf32>
    %840 = arith.mulf %563, %839 : vector<8x128xf32>
    %c140 = arith.constant 140 : index
    %841 = memref.load %arg3[%c140] : memref<193xf32, #tpu.memory_space<smem>>
    %842 = vector.broadcast %841 : f32 to vector<8x128xf32>
    %843 = arith.mulf %579, %842 : vector<8x128xf32>
    %844 = arith.addf %840, %843 : vector<8x128xf32>
    %c152 = arith.constant 152 : index
    %845 = memref.load %arg3[%c152] : memref<193xf32, #tpu.memory_space<smem>>
    %846 = vector.broadcast %845 : f32 to vector<8x128xf32>
    %847 = arith.mulf %595, %846 : vector<8x128xf32>
    %848 = arith.addf %844, %847 : vector<8x128xf32>
    %c164 = arith.constant 164 : index
    %849 = memref.load %arg3[%c164] : memref<193xf32, #tpu.memory_space<smem>>
    %850 = vector.broadcast %849 : f32 to vector<8x128xf32>
    %851 = arith.mulf %611, %850 : vector<8x128xf32>
    %852 = arith.addf %848, %851 : vector<8x128xf32>
    %c176 = arith.constant 176 : index
    %853 = memref.load %arg3[%c176] : memref<193xf32, #tpu.memory_space<smem>>
    %854 = vector.broadcast %853 : f32 to vector<8x128xf32>
    %855 = arith.mulf %627, %854 : vector<8x128xf32>
    %856 = arith.addf %852, %855 : vector<8x128xf32>
    %c188 = arith.constant 188 : index
    %857 = memref.load %arg3[%c188] : memref<193xf32, #tpu.memory_space<smem>>
    %858 = vector.broadcast %857 : f32 to vector<8x128xf32>
    %859 = arith.addf %856, %858 : vector<8x128xf32>
    %860 = arith.negf %859 : vector<8x128xf32>
    %861 = math.exp %860 : vector<8x128xf32>
    %cst_232 = arith.constant 1.000000e+00 : f32
    %862 = vector.broadcast %cst_232 : f32 to vector<8x128xf32>
    %863 = arith.addf %862, %861 : vector<8x128xf32>
    %864 = arith.divf %862, %863 : vector<8x128xf32>
    %c7_233 = arith.constant 7 : index
    %c0_234 = arith.constant 0 : index
    %c0_235 = arith.constant 0 : index
    %865 = vector.load %arg4[%c7_233, %c0_234, %c0_235] : memref<18x8x128xf32, #tpu.memory_space<vmem>>, vector<1x8x128xf32>
    %866 = vector.shape_cast %865 : vector<1x8x128xf32> to vector<8x128xf32>
    %867 = vector.shape_cast %864 : vector<8x128xf32> to vector<1x8x128xf32>
    tpu.vector_store %arg4[%c7_233, %c0_234, %c0_235], %867 {strides = array<i32>} : memref<18x8x128xf32, #tpu.memory_space<vmem>>, vector<1x8x128xf32>,
    %c129 = arith.constant 129 : index
    %868 = memref.load %arg3[%c129] : memref<193xf32, #tpu.memory_space<smem>>
    %869 = vector.broadcast %868 : f32 to vector<8x128xf32>
    %870 = arith.mulf %563, %869 : vector<8x128xf32>
    %c141 = arith.constant 141 : index
    %871 = memref.load %arg3[%c141] : memref<193xf32, #tpu.memory_space<smem>>
    %872 = vector.broadcast %871 : f32 to vector<8x128xf32>
    %873 = arith.mulf %579, %872 : vector<8x128xf32>
    %874 = arith.addf %870, %873 : vector<8x128xf32>
    %c153 = arith.constant 153 : index
    %875 = memref.load %arg3[%c153] : memref<193xf32, #tpu.memory_space<smem>>
    %876 = vector.broadcast %875 : f32 to vector<8x128xf32>
    %877 = arith.mulf %595, %876 : vector<8x128xf32>
    %878 = arith.addf %874, %877 : vector<8x128xf32>
    %c165 = arith.constant 165 : index
    %879 = memref.load %arg3[%c165] : memref<193xf32, #tpu.memory_space<smem>>
    %880 = vector.broadcast %879 : f32 to vector<8x128xf32>
    %881 = arith.mulf %611, %880 : vector<8x128xf32>
    %882 = arith.addf %878, %881 : vector<8x128xf32>
    %c177 = arith.constant 177 : index
    %883 = memref.load %arg3[%c177] : memref<193xf32, #tpu.memory_space<smem>>
    %884 = vector.broadcast %883 : f32 to vector<8x128xf32>
    %885 = arith.mulf %627, %884 : vector<8x128xf32>
    %886 = arith.addf %882, %885 : vector<8x128xf32>
    %c189 = arith.constant 189 : index
    %887 = memref.load %arg3[%c189] : memref<193xf32, #tpu.memory_space<smem>>
    %888 = vector.broadcast %887 : f32 to vector<8x128xf32>
    %889 = arith.addf %886, %888 : vector<8x128xf32>
    %890 = arith.negf %889 : vector<8x128xf32>
    %891 = math.exp %890 : vector<8x128xf32>
    %cst_236 = arith.constant 1.000000e+00 : f32
    %892 = vector.broadcast %cst_236 : f32 to vector<8x128xf32>
    %893 = arith.addf %892, %891 : vector<8x128xf32>
    %894 = arith.divf %892, %893 : vector<8x128xf32>
    %c8_237 = arith.constant 8 : index
    %c0_238 = arith.constant 0 : index
    %c0_239 = arith.constant 0 : index
    %895 = vector.load %arg4[%c8_237, %c0_238, %c0_239] : memref<18x8x128xf32, #tpu.memory_space<vmem>>, vector<1x8x128xf32>
    %896 = vector.shape_cast %895 : vector<1x8x128xf32> to vector<8x128xf32>
    %897 = vector.shape_cast %894 : vector<8x128xf32> to vector<1x8x128xf32>
    tpu.vector_store %arg4[%c8_237, %c0_238, %c0_239], %897 {strides = array<i32>} : memref<18x8x128xf32, #tpu.memory_space<vmem>>, vector<1x8x128xf32>,
    %c130 = arith.constant 130 : index
    %898 = memref.load %arg3[%c130] : memref<193xf32, #tpu.memory_space<smem>>
    %899 = vector.broadcast %898 : f32 to vector<8x128xf32>
    %900 = arith.mulf %563, %899 : vector<8x128xf32>
    %c142 = arith.constant 142 : index
    %901 = memref.load %arg3[%c142] : memref<193xf32, #tpu.memory_space<smem>>
    %902 = vector.broadcast %901 : f32 to vector<8x128xf32>
    %903 = arith.mulf %579, %902 : vector<8x128xf32>
    %904 = arith.addf %900, %903 : vector<8x128xf32>
    %c154 = arith.constant 154 : index
    %905 = memref.load %arg3[%c154] : memref<193xf32, #tpu.memory_space<smem>>
    %906 = vector.broadcast %905 : f32 to vector<8x128xf32>
    %907 = arith.mulf %595, %906 : vector<8x128xf32>
    %908 = arith.addf %904, %907 : vector<8x128xf32>
    %c166 = arith.constant 166 : index
    %909 = memref.load %arg3[%c166] : memref<193xf32, #tpu.memory_space<smem>>
    %910 = vector.broadcast %909 : f32 to vector<8x128xf32>
    %911 = arith.mulf %611, %910 : vector<8x128xf32>
    %912 = arith.addf %908, %911 : vector<8x128xf32>
    %c178 = arith.constant 178 : index
    %913 = memref.load %arg3[%c178] : memref<193xf32, #tpu.memory_space<smem>>
    %914 = vector.broadcast %913 : f32 to vector<8x128xf32>
    %915 = arith.mulf %627, %914 : vector<8x128xf32>
    %916 = arith.addf %912, %915 : vector<8x128xf32>
    %c190 = arith.constant 190 : index
    %917 = memref.load %arg3[%c190] : memref<193xf32, #tpu.memory_space<smem>>
    %918 = vector.broadcast %917 : f32 to vector<8x128xf32>
    %919 = arith.addf %916, %918 : vector<8x128xf32>
    %920 = arith.negf %919 : vector<8x128xf32>
    %921 = math.exp %920 : vector<8x128xf32>
    %cst_240 = arith.constant 1.000000e+00 : f32
    %922 = vector.broadcast %cst_240 : f32 to vector<8x128xf32>
    %923 = arith.addf %922, %921 : vector<8x128xf32>
    %924 = arith.divf %922, %923 : vector<8x128xf32>
    %c9_241 = arith.constant 9 : index
    %c0_242 = arith.constant 0 : index
    %c0_243 = arith.constant 0 : index
    %925 = vector.load %arg4[%c9_241, %c0_242, %c0_243] : memref<18x8x128xf32, #tpu.memory_space<vmem>>, vector<1x8x128xf32>
    %926 = vector.shape_cast %925 : vector<1x8x128xf32> to vector<8x128xf32>
    %927 = vector.shape_cast %924 : vector<8x128xf32> to vector<1x8x128xf32>
    tpu.vector_store %arg4[%c9_241, %c0_242, %c0_243], %927 {strides = array<i32>} : memref<18x8x128xf32, #tpu.memory_space<vmem>>, vector<1x8x128xf32>,
    %c131 = arith.constant 131 : index
    %928 = memref.load %arg3[%c131] : memref<193xf32, #tpu.memory_space<smem>>
    %929 = vector.broadcast %928 : f32 to vector<8x128xf32>
    %930 = arith.mulf %563, %929 : vector<8x128xf32>
    %c143 = arith.constant 143 : index
    %931 = memref.load %arg3[%c143] : memref<193xf32, #tpu.memory_space<smem>>
    %932 = vector.broadcast %931 : f32 to vector<8x128xf32>
    %933 = arith.mulf %579, %932 : vector<8x128xf32>
    %934 = arith.addf %930, %933 : vector<8x128xf32>
    %c155 = arith.constant 155 : index
    %935 = memref.load %arg3[%c155] : memref<193xf32, #tpu.memory_space<smem>>
    %936 = vector.broadcast %935 : f32 to vector<8x128xf32>
    %937 = arith.mulf %595, %936 : vector<8x128xf32>
    %938 = arith.addf %934, %937 : vector<8x128xf32>
    %c167 = arith.constant 167 : index
    %939 = memref.load %arg3[%c167] : memref<193xf32, #tpu.memory_space<smem>>
    %940 = vector.broadcast %939 : f32 to vector<8x128xf32>
    %941 = arith.mulf %611, %940 : vector<8x128xf32>
    %942 = arith.addf %938, %941 : vector<8x128xf32>
    %c179 = arith.constant 179 : index
    %943 = memref.load %arg3[%c179] : memref<193xf32, #tpu.memory_space<smem>>
    %944 = vector.broadcast %943 : f32 to vector<8x128xf32>
    %945 = arith.mulf %627, %944 : vector<8x128xf32>
    %946 = arith.addf %942, %945 : vector<8x128xf32>
    %c191 = arith.constant 191 : index
    %947 = memref.load %arg3[%c191] : memref<193xf32, #tpu.memory_space<smem>>
    %948 = vector.broadcast %947 : f32 to vector<8x128xf32>
    %949 = arith.addf %946, %948 : vector<8x128xf32>
    %950 = arith.negf %949 : vector<8x128xf32>
    %951 = math.exp %950 : vector<8x128xf32>
    %cst_244 = arith.constant 1.000000e+00 : f32
    %952 = vector.broadcast %cst_244 : f32 to vector<8x128xf32>
    %953 = arith.addf %952, %951 : vector<8x128xf32>
    %954 = arith.divf %952, %953 : vector<8x128xf32>
    %c10_245 = arith.constant 10 : index
    %c0_246 = arith.constant 0 : index
    %c0_247 = arith.constant 0 : index
    %955 = vector.load %arg4[%c10_245, %c0_246, %c0_247] : memref<18x8x128xf32, #tpu.memory_space<vmem>>, vector<1x8x128xf32>
    %956 = vector.shape_cast %955 : vector<1x8x128xf32> to vector<8x128xf32>
    %957 = vector.shape_cast %954 : vector<8x128xf32> to vector<1x8x128xf32>
    tpu.vector_store %arg4[%c10_245, %c0_246, %c0_247], %957 {strides = array<i32>} : memref<18x8x128xf32, #tpu.memory_space<vmem>>, vector<1x8x128xf32>,
    %c132 = arith.constant 132 : index
    %958 = memref.load %arg3[%c132] : memref<193xf32, #tpu.memory_space<smem>>
    %959 = vector.broadcast %958 : f32 to vector<8x128xf32>
    %960 = arith.mulf %563, %959 : vector<8x128xf32>
    %c144 = arith.constant 144 : index
    %961 = memref.load %arg3[%c144] : memref<193xf32, #tpu.memory_space<smem>>
    %962 = vector.broadcast %961 : f32 to vector<8x128xf32>
    %963 = arith.mulf %579, %962 : vector<8x128xf32>
    %964 = arith.addf %960, %963 : vector<8x128xf32>
    %c156 = arith.constant 156 : index
    %965 = memref.load %arg3[%c156] : memref<193xf32, #tpu.memory_space<smem>>
    %966 = vector.broadcast %965 : f32 to vector<8x128xf32>
    %967 = arith.mulf %595, %966 : vector<8x128xf32>
    %968 = arith.addf %964, %967 : vector<8x128xf32>
    %c168 = arith.constant 168 : index
    %969 = memref.load %arg3[%c168] : memref<193xf32, #tpu.memory_space<smem>>
    %970 = vector.broadcast %969 : f32 to vector<8x128xf32>
    %971 = arith.mulf %611, %970 : vector<8x128xf32>
    %972 = arith.addf %968, %971 : vector<8x128xf32>
    %c180 = arith.constant 180 : index
    %973 = memref.load %arg3[%c180] : memref<193xf32, #tpu.memory_space<smem>>
    %974 = vector.broadcast %973 : f32 to vector<8x128xf32>
    %975 = arith.mulf %627, %974 : vector<8x128xf32>
    %976 = arith.addf %972, %975 : vector<8x128xf32>
    %c192 = arith.constant 192 : index
    %977 = memref.load %arg3[%c192] : memref<193xf32, #tpu.memory_space<smem>>
    %978 = vector.broadcast %977 : f32 to vector<8x128xf32>
    %979 = arith.addf %976, %978 : vector<8x128xf32>
    %980 = arith.negf %979 : vector<8x128xf32>
    %981 = math.exp %980 : vector<8x128xf32>
    %cst_248 = arith.constant 1.000000e+00 : f32
    %982 = vector.broadcast %cst_248 : f32 to vector<8x128xf32>
    %983 = arith.addf %982, %981 : vector<8x128xf32>
    %984 = arith.divf %982, %983 : vector<8x128xf32>
    %c11_249 = arith.constant 11 : index
    %c0_250 = arith.constant 0 : index
    %c0_251 = arith.constant 0 : index
    %985 = vector.load %arg4[%c11_249, %c0_250, %c0_251] : memref<18x8x128xf32, #tpu.memory_space<vmem>>, vector<1x8x128xf32>
    %986 = vector.shape_cast %985 : vector<1x8x128xf32> to vector<8x128xf32>
    %987 = vector.shape_cast %984 : vector<8x128xf32> to vector<1x8x128xf32>
    tpu.vector_store %arg4[%c11_249, %c0_250, %c0_251], %987 {strides = array<i32>} : memref<18x8x128xf32, #tpu.memory_space<vmem>>, vector<1x8x128xf32>,
    %c12_252 = arith.constant 12 : index
    %c0_253 = arith.constant 0 : index
    %c0_254 = arith.constant 0 : index
    %988 = vector.load %arg4[%c12_252, %c0_253, %c0_254] : memref<18x8x128xf32, #tpu.memory_space<vmem>>, vector<1x8x128xf32>
    %989 = vector.shape_cast %988 : vector<1x8x128xf32> to vector<8x128xf32>
    %990 = vector.shape_cast %420 : vector<8x128xf32> to vector<1x8x128xf32>
    tpu.vector_store %arg4[%c12_252, %c0_253, %c0_254], %990 {strides = array<i32>} : memref<18x8x128xf32, #tpu.memory_space<vmem>>, vector<1x8x128xf32>,
    %991 = math.log %431 : vector<8x128xf32>
    %cst_255 = arith.constant 2.000000e+00 : f32
    %992 = vector.broadcast %cst_255 : f32 to vector<8x128xf32>
    %993 = arith.mulf %992, %991 : vector<8x128xf32>
    %c15_256 = arith.constant 15 : index
    %c0_257 = arith.constant 0 : index
    %c0_258 = arith.constant 0 : index
    %994 = vector.load %arg4[%c15_256, %c0_257, %c0_258] : memref<18x8x128xf32, #tpu.memory_space<vmem>>, vector<1x8x128xf32>
    %995 = vector.shape_cast %994 : vector<1x8x128xf32> to vector<8x128xf32>
    %996 = vector.shape_cast %993 : vector<8x128xf32> to vector<1x8x128xf32>
    tpu.vector_store %arg4[%c15_256, %c0_257, %c0_258], %996 {strides = array<i32>} : memref<18x8x128xf32, #tpu.memory_space<vmem>>, vector<1x8x128xf32>,
    %c13_259 = arith.constant 13 : index
    %c0_260 = arith.constant 0 : index
    %c0_261 = arith.constant 0 : index
    %997 = vector.load %arg4[%c13_259, %c0_260, %c0_261] : memref<18x8x128xf32, #tpu.memory_space<vmem>>, vector<1x8x128xf32>
    %998 = vector.shape_cast %997 : vector<1x8x128xf32> to vector<8x128xf32>
    %999 = vector.shape_cast %472 : vector<8x128xf32> to vector<1x8x128xf32>
    tpu.vector_store %arg4[%c13_259, %c0_260, %c0_261], %999 {strides = array<i32>} : memref<18x8x128xf32, #tpu.memory_space<vmem>>, vector<1x8x128xf32>,
    %1000 = math.log %483 : vector<8x128xf32>
    %cst_262 = arith.constant 2.000000e+00 : f32
    %1001 = vector.broadcast %cst_262 : f32 to vector<8x128xf32>
    %1002 = arith.mulf %1001, %1000 : vector<8x128xf32>
    %c16_263 = arith.constant 16 : index
    %c0_264 = arith.constant 0 : index
    %c0_265 = arith.constant 0 : index
    %1003 = vector.load %arg4[%c16_263, %c0_264, %c0_265] : memref<18x8x128xf32, #tpu.memory_space<vmem>>, vector<1x8x128xf32>
    %1004 = vector.shape_cast %1003 : vector<1x8x128xf32> to vector<8x128xf32>
    %1005 = vector.shape_cast %1002 : vector<8x128xf32> to vector<1x8x128xf32>
    tpu.vector_store %arg4[%c16_263, %c0_264, %c0_265], %1005 {strides = array<i32>} : memref<18x8x128xf32, #tpu.memory_space<vmem>>, vector<1x8x128xf32>,
    %c14_266 = arith.constant 14 : index
    %c0_267 = arith.constant 0 : index
    %c0_268 = arith.constant 0 : index
    %1006 = vector.load %arg4[%c14_266, %c0_267, %c0_268] : memref<18x8x128xf32, #tpu.memory_space<vmem>>, vector<1x8x128xf32>
    %1007 = vector.shape_cast %1006 : vector<1x8x128xf32> to vector<8x128xf32>
    %1008 = vector.shape_cast %524 : vector<8x128xf32> to vector<1x8x128xf32>
    tpu.vector_store %arg4[%c14_266, %c0_267, %c0_268], %1008 {strides = array<i32>} : memref<18x8x128xf32, #tpu.memory_space<vmem>>, vector<1x8x128xf32>,
    %1009 = math.log %535 : vector<8x128xf32>
    %cst_269 = arith.constant 2.000000e+00 : f32
    %1010 = vector.broadcast %cst_269 : f32 to vector<8x128xf32>
    %1011 = arith.mulf %1010, %1009 : vector<8x128xf32>
    %c17_270 = arith.constant 17 : index
    %c0_271 = arith.constant 0 : index
    %c0_272 = arith.constant 0 : index
    %1012 = vector.load %arg4[%c17_270, %c0_271, %c0_272] : memref<18x8x128xf32, #tpu.memory_space<vmem>>, vector<1x8x128xf32>
    %1013 = vector.shape_cast %1012 : vector<1x8x128xf32> to vector<8x128xf32>
    %1014 = vector.shape_cast %1011 : vector<8x128xf32> to vector<1x8x128xf32>
    tpu.vector_store %arg4[%c17_270, %c0_271, %c0_272], %1014 {strides = array<i32>} : memref<18x8x128xf32, #tpu.memory_space<vmem>>, vector<1x8x128xf32>,
    return
  }
  func.func @transform_0(%arg0: i32) -> (i32, i32, i32) {
    %c0_i32 = arith.constant 0 : i32
    %c0_i32_0 = arith.constant 0 : i32
    %c0_i32_1 = arith.constant 0 : i32
    return %c0_i32, %arg0, %c0_i32_0 : i32, i32, i32
  }
  func.func @transform_1(%arg0: i32) -> (i32, i32, i32) {
    %c0_i32 = arith.constant 0 : i32
    %c0_i32_0 = arith.constant 0 : i32
    %c0_i32_1 = arith.constant 0 : i32
    return %c0_i32, %arg0, %c0_i32_0 : i32, i32, i32
  }
  func.func @transform_2(%arg0: i32) -> i32 {
    %c0_i32 = arith.constant 0 : i32
    %c0_i32_0 = arith.constant 0 : i32
    return %c0_i32 : i32
  }
  func.func @transform_3(%arg0: i32) -> (i32, i32, i32) {
    %c0_i32 = arith.constant 0 : i32
    %c0_i32_0 = arith.constant 0 : i32
    %c0_i32_1 = arith.constant 0 : i32
    return %c0_i32, %arg0, %c0_i32_0 : i32, i32, i32
  }
}

</mosaic_0001>

<llo_original>
// kernel: tpu_custom_call.1
$region0: #{tpu_custom_call.1}
  #allocation0 [shape = 'u32[]', space=smem, size = 0x4, offset = 0x4, fixed_abs, tag = 'smem constant byte address 0x4 - core index']
  #allocation1 [shape = 'u32[144,128]{1,0:T(1,128)}', space=vmem, size = 0x12000, scoped, tag = 'internal scratch']
  %s0 = inlined_call_operand.hbm [shape: f32[12,8,128], index: 0, kind: input, shape index: {}]
  %s1 = inlined_call_operand.hbm [shape: f32[3,8,128], index: 1, kind: input, shape index: {}]
  %s2 = inlined_call_operand.vmem [shape: f32[193], index: 2, kind: input, shape index: {}]
  %s3 = inlined_call_operand.hbm [shape: f32[18,8,128], index: 3, kind: output, shape index: {}]
  %s4 = sld [smem:[#allocation0]]
  $region34: #{tpu_custom_call.1} parent=0
    _
  %s6 = ssub.s32 1, %s4
  %s7 = scalar_select 0, %s6, %s4
  $region1: #{tpu_custom_call.1} parent=0
    #allocation2 [shape = 'u8[49152]{0}', space=vmem, size = 0xc000, scoped, tag = 'input window, operand 0, single buffered']
    #allocation3 [shape = 's32[1]{0}', space=sflag, size = 0x4, scoped, tag = 'scoped memory for tpu_custom_call.1']
    #allocation4 [shape = 's32[1]{0}', space=sflag, size = 0x4, scoped, tag = 'scoped memory for tpu_custom_call.1']
    #allocation5 [shape = 's32[1]{0}', space=sflag, size = 0x4, scoped, tag = 'scoped memory for tpu_custom_call.1']
    #allocation6 [shape = 'u8[12288]{0}', space=vmem, size = 0x3000, scoped, tag = 'input window, operand 1, single buffered']
    #allocation7 [shape = 's32[1]{0}', space=sflag, size = 0x4, scoped, tag = 'scoped memory for tpu_custom_call.1']
    #allocation8 [shape = 'u8[1024]{0}', space=smem, size = 0x400, scoped, tag = 'input window, operand 2, single buffered']
    #allocation9 [shape = 'u8[73728]{0}', space=vmem, size = 0x12000, scoped, tag = 'output window, operand 0, single buffered']
    %8 = vsyncpa [#allocation3], 0
    %9 = vsyncpa [#allocation7], 0
    %10 = vsyncpa [#allocation5], 0
    %11 = vsyncpa [#allocation4], 0
    // Predicated region
    $region2: #{tpu_custom_call.1} parent=1 // pred_check
      _
    $region3: #{tpu_custom_call.1} parent=1 // pred_check_branch
      %13 = sbr.rel (0) target = $region5
    $region4: #{tpu_custom_call.1} parent=1 // pred_region
      %s15 = ssub.s32 1536, 1536
      %16 = vsyncadd [#allocation3], %s15
      %s17 = sshll.u32 [#allocation2], 4
      %s18 = int_to_ptr.vmem [resolvable:$true] %s17
      %23 = dma.hbm_to_vmem [thread:$0]  %s0, 1536, %s18, [#allocation3], 128, 128, 8
    $region5: #{tpu_custom_call.1} parent=1 // pred_fallthru
      _
    // Predicated region
    $region6: #{tpu_custom_call.1} parent=1 // pred_check
      _
    $region7: #{tpu_custom_call.1} parent=1 // pred_check_branch
      %25 = sbr.rel (0) target = $region9
    $region8: #{tpu_custom_call.1} parent=1 // pred_region
      %s27 = ssub.s32 384, 384
      %28 = vsyncadd [#allocation7], %s27
      %s29 = sshll.u32 [#allocation6], 4
      %s30 = int_to_ptr.vmem [resolvable:$true] %s29
      %35 = dma.hbm_to_vmem [thread:$0]  %s1, 384, %s30, [#allocation7], 128, 128, 8
    $region9: #{tpu_custom_call.1} parent=1 // pred_fallthru
      _
    // Predicated region
    $region10: #{tpu_custom_call.1} parent=1 // pred_check
      _
    $region11: #{tpu_custom_call.1} parent=1 // pred_check_branch
      %37 = sbr.rel (0) target = $region13
    $region12: #{tpu_custom_call.1} parent=1 // pred_region
      %s39 = ssub.s32 32, 32
      %40 = vsyncadd [#allocation5], %s39
      %s42 = sshll.u32 %s2, 4
      %s43 = int_to_ptr.vmem [resolvable:$true] %s42
      %45 = dma.vmem_to_smem %s43, 32, [#allocation8], [#allocation5]
    $region13: #{tpu_custom_call.1} parent=1 // pred_fallthru
      _
    // Predicated region
    $region14: #{tpu_custom_call.1} parent=1 // pred_check
      _
    $region15: #{tpu_custom_call.1} parent=1 // pred_check_branch
      %47 = sbr.rel (0) target = $region17
    $region16: #{tpu_custom_call.1} parent=1 // pred_region
      %48 = dma.done [#allocation3], 1536
    $region17: #{tpu_custom_call.1} parent=1 // pred_fallthru
      _
    // Predicated region
    $region18: #{tpu_custom_call.1} parent=1 // pred_check
      _
    $region19: #{tpu_custom_call.1} parent=1 // pred_check_branch
      %50 = sbr.rel (0) target = $region21
    $region20: #{tpu_custom_call.1} parent=1 // pred_region
      %51 = dma.done [#allocation7], 384
    $region21: #{tpu_custom_call.1} parent=1 // pred_fallthru
      _
    // Predicated region
    $region22: #{tpu_custom_call.1} parent=1 // pred_check
      _
    $region23: #{tpu_custom_call.1} parent=1 // pred_check_branch
      %53 = sbr.rel (0) target = $region25
    $region24: #{tpu_custom_call.1} parent=1 // pred_region
      %54 = dma.done [#allocation5], 32
    $region25: #{tpu_custom_call.1} parent=1 // pred_fallthru
      _
    %55 = sfence
    %v56 = vld [vmem:[#allocation2] sm:$0xff]
    %s57 = sld [smem:[#allocation8]]
    %v58 = vstv %s57
    %v59 = vmul.f32 %v56, %v58
    %s60 = scalar_lea.vmem [#allocation2], 8
    %v61 = vld [vmem:[%s60] sm:$0xff]
    %s62 = sld [smem:[#allocation8 + $0x5]]
    %v63 = vstv %s62
    %v64 = vmul.f32 %v61, %v63
    %v65 = vadd.f32 %v59, %v64
    %s66 = scalar_lea.vmem [#allocation2], 16
    %v67 = vld [vmem:[%s66] sm:$0xff]
    %s68 = sld [smem:[#allocation8 + $0xa]]
    %v69 = vstv %s68
    %v70 = vmul.f32 %v67, %v69
    %v71 = vadd.f32 %v65, %v70
    %s72 = scalar_lea.vmem [#allocation2], 24
    %v73 = vld [vmem:[%s72] sm:$0xff]
    %s74 = sld [smem:[#allocation8 + $0xf]]
    %v75 = vstv %s74
    %v76 = vmul.f32 %v73, %v75
    %v77 = vadd.f32 %v71, %v76
    %s78 = scalar_lea.vmem [#allocation2], 32
    %v79 = vld [vmem:[%s78] sm:$0xff]
    %s80 = sld [smem:[#allocation8 + $0x14]]
    %v81 = vstv %s80
    %v82 = vmul.f32 %v79, %v81
    %v83 = vadd.f32 %v77, %v82
    %s84 = scalar_lea.vmem [#allocation2], 40
    %v85 = vld [vmem:[%s84] sm:$0xff]
    %s86 = sld [smem:[#allocation8 + $0x19]]
    %v87 = vstv %s86
    %v88 = vmul.f32 %v85, %v87
    %v89 = vadd.f32 %v83, %v88
    %s90 = scalar_lea.vmem [#allocation2], 48
    %v91 = vld [vmem:[%s90] sm:$0xff]
    %s92 = sld [smem:[#allocation8 + $0x1e]]
    %v93 = vstv %s92
    %v94 = vmul.f32 %v91, %v93
    %v95 = vadd.f32 %v89, %v94
    %s96 = scalar_lea.vmem [#allocation2], 56
    %v97 = vld [vmem:[%s96] sm:$0xff]
    %s98 = sld [smem:[#allocation8 + $0x23]]
    %v99 = vstv %s98
    %v100 = vmul.f32 %v97, %v99
    %v101 = vadd.f32 %v95, %v100
    %s102 = scalar_lea.vmem [#allocation2], 64
    %v103 = vld [vmem:[%s102] sm:$0xff]
    %s104 = sld [smem:[#allocation8 + $0x28]]
    %v105 = vstv %s104
    %v106 = vmul.f32 %v103, %v105
    %v107 = vadd.f32 %v101, %v106
    %s108 = scalar_lea.vmem [#allocation2], 72
    %v109 = vld [vmem:[%s108] sm:$0xff]
    %s110 = sld [smem:[#allocation8 + $0x2d]]
    %v111 = vstv %s110
    %v112 = vmul.f32 %v109, %v111
    %v113 = vadd.f32 %v107, %v112
    %s114 = scalar_lea.vmem [#allocation2], 80
    %v115 = vld [vmem:[%s114] sm:$0xff]
    %s116 = sld [smem:[#allocation8 + $0x32]]
    %v117 = vstv %s116
    %v118 = vmul.f32 %v115, %v117
    %v119 = vadd.f32 %v113, %v118
    %s120 = scalar_lea.vmem [#allocation2], 88
    %v121 = vld [vmem:[%s120] sm:$0xff]
    %s122 = sld [smem:[#allocation8 + $0x37]]
    %v123 = vstv %s122
    %v124 = vmul.f32 %v121, %v123
    %v125 = vadd.f32 %v119, %v124
    %s126 = sld [smem:[#allocation8 + $0x3c]]
    %v127 = vstv %s126
    %v128 = vadd.f32 %v125, %v127
    %v129 = vmax.f32 %v128, 0.0
    %s130 = sld [smem:[#allocation8 + $0x1]]
    %v131 = vstv %s130
    %v132 = vmul.f32 %v56, %v131
    %s133 = sld [smem:[#allocation8 + $0x6]]
    %v134 = vstv %s133
    %v135 = vmul.f32 %v61, %v134
    %v136 = vadd.f32 %v132, %v135
    %s137 = sld [smem:[#allocation8 + $0xb]]
    %v138 = vstv %s137
    %v139 = vmul.f32 %v67, %v138
    %v140 = vadd.f32 %v136, %v139
    %s141 = sld [smem:[#allocation8 + $0x10]]
    %v142 = vstv %s141
    %v143 = vmul.f32 %v73, %v142
    %v144 = vadd.f32 %v140, %v143
    %s145 = sld [smem:[#allocation8 + $0x15]]
    %v146 = vstv %s145
    %v147 = vmul.f32 %v79, %v146
    %v148 = vadd.f32 %v144, %v147
    %s149 = sld [smem:[#allocation8 + $0x1a]]
    %v150 = vstv %s149
    %v151 = vmul.f32 %v85, %v150
    %v152 = vadd.f32 %v148, %v151
    %s153 = sld [smem:[#allocation8 + $0x1f]]
    %v154 = vstv %s153
    %v155 = vmul.f32 %v91, %v154
    %v156 = vadd.f32 %v152, %v155
    %s157 = sld [smem:[#allocation8 + $0x24]]
    %v158 = vstv %s157
    %v159 = vmul.f32 %v97, %v158
    %v160 = vadd.f32 %v156, %v159
    %s161 = sld [smem:[#allocation8 + $0x29]]
    %v162 = vstv %s161
    %v163 = vmul.f32 %v103, %v162
    %v164 = vadd.f32 %v160, %v163
    %s165 = sld [smem:[#allocation8 + $0x2e]]
    %v166 = vstv %s165
    %v167 = vmul.f32 %v109, %v166
    %v168 = vadd.f32 %v164, %v167
    %s169 = sld [smem:[#allocation8 + $0x33]]
    %v170 = vstv %s169
    %v171 = vmul.f32 %v115, %v170
    %v172 = vadd.f32 %v168, %v171
    %s173 = sld [smem:[#allocation8 + $0x38]]
    %v174 = vstv %s173
    %v175 = vmul.f32 %v121, %v174
    %v176 = vadd.f32 %v172, %v175
    %s177 = sld [smem:[#allocation8 + $0x3d]]
    %v178 = vstv %s177
    %v179 = vadd.f32 %v176, %v178
    %v180 = vmax.f32 %v179, 0.0
    %s181 = sld [smem:[#allocation8 + $0x2]]
    %v182 = vstv %s181
    %v183 = vmul.f32 %v56, %v182
    %s184 = sld [smem:[#allocation8 + $0x7]]
    %v185 = vstv %s184
    %v186 = vmul.f32 %v61, %v185
    %v187 = vadd.f32 %v183, %v186
    %s188 = sld [smem:[#allocation8 + $0xc]]
    %v189 = vstv %s188
    %v190 = vmul.f32 %v67, %v189
    %v191 = vadd.f32 %v187, %v190
    %s192 = sld [smem:[#allocation8 + $0x11]]
    %v193 = vstv %s192
    %v194 = vmul.f32 %v73, %v193
    %v195 = vadd.f32 %v191, %v194
    %s196 = sld [smem:[#allocation8 + $0x16]]
    %v197 = vstv %s196
    %v198 = vmul.f32 %v79, %v197
    %v199 = vadd.f32 %v195, %v198
    %s200 = sld [smem:[#allocation8 + $0x1b]]
    %v201 = vstv %s200
    %v202 = vmul.f32 %v85, %v201
    %v203 = vadd.f32 %v199, %v202
    %s204 = sld [smem:[#allocation8 + $0x20]]
    %v205 = vstv %s204
    %v206 = vmul.f32 %v91, %v205
    %v207 = vadd.f32 %v203, %v206
    %s208 = sld [smem:[#allocation8 + $0x25]]
    %v209 = vstv %s208
    %v210 = vmul.f32 %v97, %v209
    %v211 = vadd.f32 %v207, %v210
    %s212 = sld [smem:[#allocation8 + $0x2a]]
    %v213 = vstv %s212
    %v214 = vmul.f32 %v103, %v213
    %v215 = vadd.f32 %v211, %v214
    %s216 = sld [smem:[#allocation8 + $0x2f]]
    %v217 = vstv %s216
    %v218 = vmul.f32 %v109, %v217
    %v219 = vadd.f32 %v215, %v218
    %s220 = sld [smem:[#allocation8 + $0x34]]
    %v221 = vstv %s220
    %v222 = vmul.f32 %v115, %v221
    %v223 = vadd.f32 %v219, %v222
    %s224 = sld [smem:[#allocation8 + $0x39]]
    %v225 = vstv %s224
    %v226 = vmul.f32 %v121, %v225
    %v227 = vadd.f32 %v223, %v226
    %s228 = sld [smem:[#allocation8 + $0x3e]]
    %v229 = vstv %s228
    %v230 = vadd.f32 %v227, %v229
    %v231 = vmax.f32 %v230, 0.0
    %s232 = sld [smem:[#allocation8 + $0x3]]
    %v233 = vstv %s232
    %v234 = vmul.f32 %v56, %v233
    %s235 = sld [smem:[#allocation8 + $0x8]]
    %v236 = vstv %s235
    %v237 = vmul.f32 %v61, %v236
    %v238 = vadd.f32 %v234, %v237
    %s239 = sld [smem:[#allocation8 + $0xd]]
    %v240 = vstv %s239
    %v241 = vmul.f32 %v67, %v240
    %v242 = vadd.f32 %v238, %v241
    %s243 = sld [smem:[#allocation8 + $0x12]]
    %v244 = vstv %s243
    %v245 = vmul.f32 %v73, %v244
    %v246 = vadd.f32 %v242, %v245
    %s247 = sld [smem:[#allocation8 + $0x17]]
    %v248 = vstv %s247
    %v249 = vmul.f32 %v79, %v248
    %v250 = vadd.f32 %v246, %v249
    %s251 = sld [smem:[#allocation8 + $0x1c]]
    %v252 = vstv %s251
    %v253 = vmul.f32 %v85, %v252
    %v254 = vadd.f32 %v250, %v253
    %s255 = sld [smem:[#allocation8 + $0x21]]
    %v256 = vstv %s255
    %v257 = vmul.f32 %v91, %v256
    %v258 = vadd.f32 %v254, %v257
    %s259 = sld [smem:[#allocation8 + $0x26]]
    %v260 = vstv %s259
    %v261 = vmul.f32 %v97, %v260
    %v262 = vadd.f32 %v258, %v261
    %s263 = sld [smem:[#allocation8 + $0x2b]]
    %v264 = vstv %s263
    %v265 = vmul.f32 %v103, %v264
    %v266 = vadd.f32 %v262, %v265
    %s267 = sld [smem:[#allocation8 + $0x30]]
    %v268 = vstv %s267
    %v269 = vmul.f32 %v109, %v268
    %v270 = vadd.f32 %v266, %v269
    %s271 = sld [smem:[#allocation8 + $0x35]]
    %v272 = vstv %s271
    %v273 = vmul.f32 %v115, %v272
    %v274 = vadd.f32 %v270, %v273
    %s275 = sld [smem:[#allocation8 + $0x3a]]
    %v276 = vstv %s275
    %v277 = vmul.f32 %v121, %v276
    %v278 = vadd.f32 %v274, %v277
    %s279 = sld [smem:[#allocation8 + $0x3f]]
    %v280 = vstv %s279
    %v281 = vadd.f32 %v278, %v280
    %v282 = vmax.f32 %v281, 0.0
    %s283 = sld [smem:[#allocation8 + $0x4]]
    %v284 = vstv %s283
    %v285 = vmul.f32 %v56, %v284
    %s286 = sld [smem:[#allocation8 + $0x9]]
    %v287 = vstv %s286
    %v288 = vmul.f32 %v61, %v287
    %v289 = vadd.f32 %v285, %v288
    %s290 = sld [smem:[#allocation8 + $0xe]]
    %v291 = vstv %s290
    %v292 = vmul.f32 %v67, %v291
    %v293 = vadd.f32 %v289, %v292
    %s294 = sld [smem:[#allocation8 + $0x13]]
    %v295 = vstv %s294
    %v296 = vmul.f32 %v73, %v295
    %v297 = vadd.f32 %v293, %v296
    %s298 = sld [smem:[#allocation8 + $0x18]]
    %v299 = vstv %s298
    %v300 = vmul.f32 %v79, %v299
    %v301 = vadd.f32 %v297, %v300
    %s302 = sld [smem:[#allocation8 + $0x1d]]
    %v303 = vstv %s302
    %v304 = vmul.f32 %v85, %v303
    %v305 = vadd.f32 %v301, %v304
    %s306 = sld [smem:[#allocation8 + $0x22]]
    %v307 = vstv %s306
    %v308 = vmul.f32 %v91, %v307
    %v309 = vadd.f32 %v305, %v308
    %s310 = sld [smem:[#allocation8 + $0x27]]
    %v311 = vstv %s310
    %v312 = vmul.f32 %v97, %v311
    %v313 = vadd.f32 %v309, %v312
    %s314 = sld [smem:[#allocation8 + $0x2c]]
    %v315 = vstv %s314
    %v316 = vmul.f32 %v103, %v315
    %v317 = vadd.f32 %v313, %v316
    %s318 = sld [smem:[#allocation8 + $0x31]]
    %v319 = vstv %s318
    %v320 = vmul.f32 %v109, %v319
    %v321 = vadd.f32 %v317, %v320
    %s322 = sld [smem:[#allocation8 + $0x36]]
    %v323 = vstv %s322
    %v324 = vmul.f32 %v115, %v323
    %v325 = vadd.f32 %v321, %v324
    %s326 = sld [smem:[#allocation8 + $0x3b]]
    %v327 = vstv %s326
    %v328 = vmul.f32 %v121, %v327
    %v329 = vadd.f32 %v325, %v328
    %s330 = sld [smem:[#allocation8 + $0x40]]
    %v331 = vstv %s330
    %v332 = vadd.f32 %v329, %v331
    %v333 = vmax.f32 %v332, 0.0
    %s334 = sld [smem:[#allocation8 + $0x41]]
    %v335 = vstv %s334
    %v336 = vmul.f32 %v129, %v335
    %s337 = sld [smem:[#allocation8 + $0x53]]
    %v338 = vstv %s337
    %v339 = vmul.f32 %v129, %v338
    %s340 = sld [smem:[#allocation8 + $0x44]]
    %v341 = vstv %s340
    %v342 = vmul.f32 %v180, %v341
    %v343 = vadd.f32 %v336, %v342
    %s344 = sld [smem:[#allocation8 + $0x56]]
    %v345 = vstv %s344
    %v346 = vmul.f32 %v180, %v345
    %v347 = vadd.f32 %v339, %v346
    %s348 = sld [smem:[#allocation8 + $0x47]]
    %v349 = vstv %s348
    %v350 = vmul.f32 %v231, %v349
    %v351 = vadd.f32 %v343, %v350
    %s352 = sld [smem:[#allocation8 + $0x59]]
    %v353 = vstv %s352
    %v354 = vmul.f32 %v231, %v353
    %v355 = vadd.f32 %v347, %v354
    %s356 = sld [smem:[#allocation8 + $0x4a]]
    %v357 = vstv %s356
    %v358 = vmul.f32 %v282, %v357
    %v359 = vadd.f32 %v351, %v358
    %s360 = sld [smem:[#allocation8 + $0x5c]]
    %v361 = vstv %s360
    %v362 = vmul.f32 %v282, %v361
    %v363 = vadd.f32 %v355, %v362
    %s364 = sld [smem:[#allocation8 + $0x4d]]
    %v365 = vstv %s364
    %v366 = vmul.f32 %v333, %v365
    %v367 = vadd.f32 %v359, %v366
    %s368 = sld [smem:[#allocation8 + $0x5f]]
    %v369 = vstv %s368
    %v370 = vmul.f32 %v333, %v369
    %v371 = vadd.f32 %v363, %v370
    %s372 = sld [smem:[#allocation8 + $0x50]]
    %v373 = vstv %s372
    %v374 = vadd.f32 %v367, %v373
    %s375 = sld [smem:[#allocation8 + $0x62]]
    %v376 = vstv %s375
    %v377 = vadd.f32 %v371, %v376
    %v378 = vmax.f32 %v377, 0.0
    %v379 = vand.u32 2147483647, %v377
    %v380 = vsub.f32 0.0, %v379
    %v381 = vmul.f32 %v380, 1.442695
    %v382 = vpow.pop %v381
    %v383 = vadd.f32 %v382, 1.0
    %v384 = vlog2.pop %v383
    %v385 = vmul.f32 %v384, 0.6931472
    %v386 = vmul.f32 -0.5, %v382
    %v387 = vadd.f32 %v386, 1.0
    %v388 = vmul.f32 %v387, %v382
    %v389 = vand.u32 2147483647, %v382
    %vm390 = vcmp.lt.f32.partialorder %v389, 0.0004427343
    %v391 = vsel %vm390, %v388, %v385
    %v392 = vadd.f32 %v378, %v391
    %s393 = sld [smem:[#allocation8 + $0x42]]
    %v394 = vstv %s393
    %v395 = vmul.f32 %v129, %v394
    %s396 = sld [smem:[#allocation8 + $0x54]]
    %v397 = vstv %s396
    %v398 = vmul.f32 %v129, %v397
    %s399 = sld [smem:[#allocation8 + $0x45]]
    %v400 = vstv %s399
    %v401 = vmul.f32 %v180, %v400
    %v402 = vadd.f32 %v395, %v401
    %s403 = sld [smem:[#allocation8 + $0x57]]
    %v404 = vstv %s403
    %v405 = vmul.f32 %v180, %v404
    %v406 = vadd.f32 %v398, %v405
    %s407 = sld [smem:[#allocation8 + $0x48]]
    %v408 = vstv %s407
    %v409 = vmul.f32 %v231, %v408
    %v410 = vadd.f32 %v402, %v409
    %s411 = sld [smem:[#allocation8 + $0x5a]]
    %v412 = vstv %s411
    %v413 = vmul.f32 %v231, %v412
    %v414 = vadd.f32 %v406, %v413
    %s415 = sld [smem:[#allocation8 + $0x4b]]
    %v416 = vstv %s415
    %v417 = vmul.f32 %v282, %v416
    %v418 = vadd.f32 %v410, %v417
    %s419 = sld [smem:[#allocation8 + $0x5d]]
    %v420 = vstv %s419
    %v421 = vmul.f32 %v282, %v420
    %v422 = vadd.f32 %v414, %v421
    %s423 = sld [smem:[#allocation8 + $0x4e]]
    %v424 = vstv %s423
    %v425 = vmul.f32 %v333, %v424
    %v426 = vadd.f32 %v418, %v425
    %s427 = sld [smem:[#allocation8 + $0x60]]
    %v428 = vstv %s427
    %v429 = vmul.f32 %v333, %v428
    %v430 = vadd.f32 %v422, %v429
    %s431 = sld [smem:[#allocation8 + $0x51]]
    %v432 = vstv %s431
    %v433 = vadd.f32 %v426, %v432
    %s434 = sld [smem:[#allocation8 + $0x63]]
    %v435 = vstv %s434
    %v436 = vadd.f32 %v430, %v435
    %v437 = vmax.f32 %v436, 0.0
    %v438 = vand.u32 2147483647, %v436
    %v439 = vsub.f32 0.0, %v438
    %v440 = vmul.f32 %v439, 1.442695
    %v441 = vpow.pop %v440
    %v442 = vadd.f32 %v441, 1.0
    %v443 = vlog2.pop %v442
    %v444 = vmul.f32 %v443, 0.6931472
    %v445 = vmul.f32 -0.5, %v441
    %v446 = vadd.f32 %v445, 1.0
    %v447 = vmul.f32 %v446, %v441
    %v448 = vand.u32 2147483647, %v441
    %vm449 = vcmp.lt.f32.partialorder %v448, 0.0004427343
    %v450 = vsel %vm449, %v447, %v444
    %v451 = vadd.f32 %v437, %v450
    %s452 = sld [smem:[#allocation8 + $0x43]]
    %v453 = vstv %s452
    %v454 = vmul.f32 %v129, %v453
    %s455 = sld [smem:[#allocation8 + $0x55]]
    %v456 = vstv %s455
    %v457 = vmul.f32 %v129, %v456
    %s458 = sld [smem:[#allocation8 + $0x46]]
    %v459 = vstv %s458
    %v460 = vmul.f32 %v180, %v459
    %v461 = vadd.f32 %v454, %v460
    %s462 = sld [smem:[#allocation8 + $0x58]]
    %v463 = vstv %s462
    %v464 = vmul.f32 %v180, %v463
    %v465 = vadd.f32 %v457, %v464
    %s466 = sld [smem:[#allocation8 + $0x49]]
    %v467 = vstv %s466
    %v468 = vmul.f32 %v231, %v467
    %v469 = vadd.f32 %v461, %v468
    %s470 = sld [smem:[#allocation8 + $0x5b]]
    %v471 = vstv %s470
    %v472 = vmul.f32 %v231, %v471
    %v473 = vadd.f32 %v465, %v472
    %s474 = sld [smem:[#allocation8 + $0x4c]]
    %v475 = vstv %s474
    %v476 = vmul.f32 %v282, %v475
    %v477 = vadd.f32 %v469, %v476
    %s478 = sld [smem:[#allocation8 + $0x5e]]
    %v479 = vstv %s478
    %v480 = vmul.f32 %v282, %v479
    %v481 = vadd.f32 %v473, %v480
    %s482 = sld [smem:[#allocation8 + $0x4f]]
    %v483 = vstv %s482
    %v484 = vmul.f32 %v333, %v483
    %v485 = vadd.f32 %v477, %v484
    %s486 = sld [smem:[#allocation8 + $0x61]]
    %v487 = vstv %s486
    %v488 = vmul.f32 %v333, %v487
    %v489 = vadd.f32 %v481, %v488
    %s490 = sld [smem:[#allocation8 + $0x52]]
    %v491 = vstv %s490
    %v492 = vadd.f32 %v485, %v491
    %s493 = sld [smem:[#allocation8 + $0x64]]
    %v494 = vstv %s493
    %v495 = vadd.f32 %v489, %v494
    %v496 = vmax.f32 %v495, 0.0
    %v497 = vand.u32 2147483647, %v495
    %v498 = vsub.f32 0.0, %v497
    %v499 = vmul.f32 %v498, 1.442695
    %v500 = vpow.pop %v499
    %v501 = vadd.f32 %v500, 1.0
    %v502 = vlog2.pop %v501
    %v503 = vmul.f32 %v502, 0.6931472
    %v504 = vmul.f32 -0.5, %v500
    %v505 = vadd.f32 %v504, 1.0
    %v506 = vmul.f32 %v505, %v500
    %v507 = vand.u32 2147483647, %v500
    %vm508 = vcmp.lt.f32.partialorder %v507, 0.0004427343
    %v509 = vsel %vm508, %v506, %v503
    %v510 = vadd.f32 %v496, %v509
    %v511 = vld [vmem:[#allocation6] sm:$0xff]
    %v512 = vmul.f32 %v511, %v392
    %v513 = vadd.f32 %v374, %v512
    %s514 = scalar_lea.vmem [#allocation6], 8
    %v515 = vld [vmem:[%s514] sm:$0xff]
    %v516 = vmul.f32 %v515, %v451
    %v517 = vadd.f32 %v433, %v516
    %s518 = scalar_lea.vmem [#allocation6], 16
    %v519 = vld [vmem:[%s518] sm:$0xff]
    %v520 = vmul.f32 %v519, %v510
    %v521 = vadd.f32 %v492, %v520
    %s522 = sld [smem:[#allocation8 + $0x65]]
    %v523 = vstv %s522
    %v524 = vmul.f32 %v513, %v523
    %s525 = sld [smem:[#allocation8 + $0x6a]]
    %v526 = vstv %s525
    %v527 = vmul.f32 %v517, %v526
    %v528 = vadd.f32 %v524, %v527
    %s529 = sld [smem:[#allocation8 + $0x6f]]
    %v530 = vstv %s529
    %v531 = vmul.f32 %v521, %v530
    %v532 = vadd.f32 %v528, %v531
    %s533 = sld [smem:[#allocation8 + $0x74]]
    %v534 = vstv %s533
    %v535 = vadd.f32 %v532, %v534
    %v536 = vmax.f32 %v535, 0.0
    %s537 = sld [smem:[#allocation8 + $0x66]]
    %v538 = vstv %s537
    %v539 = vmul.f32 %v513, %v538
    %s540 = sld [smem:[#allocation8 + $0x6b]]
    %v541 = vstv %s540
    %v542 = vmul.f32 %v517, %v541
    %v543 = vadd.f32 %v539, %v542
    %s544 = sld [smem:[#allocation8 + $0x70]]
    %v545 = vstv %s544
    %v546 = vmul.f32 %v521, %v545
    %v547 = vadd.f32 %v543, %v546
    %s548 = sld [smem:[#allocation8 + $0x75]]
    %v549 = vstv %s548
    %v550 = vadd.f32 %v547, %v549
    %v551 = vmax.f32 %v550, 0.0
    %s552 = sld [smem:[#allocation8 + $0x67]]
    %v553 = vstv %s552
    %v554 = vmul.f32 %v513, %v553
    %s555 = sld [smem:[#allocation8 + $0x6c]]
    %v556 = vstv %s555
    %v557 = vmul.f32 %v517, %v556
    %v558 = vadd.f32 %v554, %v557
    %s559 = sld [smem:[#allocation8 + $0x71]]
    %v560 = vstv %s559
    %v561 = vmul.f32 %v521, %v560
    %v562 = vadd.f32 %v558, %v561
    %s563 = sld [smem:[#allocation8 + $0x76]]
    %v564 = vstv %s563
    %v565 = vadd.f32 %v562, %v564
    %v566 = vmax.f32 %v565, 0.0
    %s567 = sld [smem:[#allocation8 + $0x68]]
    %v568 = vstv %s567
    %v569 = vmul.f32 %v513, %v568
    %s570 = sld [smem:[#allocation8 + $0x6d]]
    %v571 = vstv %s570
    %v572 = vmul.f32 %v517, %v571
    %v573 = vadd.f32 %v569, %v572
    %s574 = sld [smem:[#allocation8 + $0x72]]
    %v575 = vstv %s574
    %v576 = vmul.f32 %v521, %v575
    %v577 = vadd.f32 %v573, %v576
    %s578 = sld [smem:[#allocation8 + $0x77]]
    %v579 = vstv %s578
    %v580 = vadd.f32 %v577, %v579
    %v581 = vmax.f32 %v580, 0.0
    %s582 = sld [smem:[#allocation8 + $0x69]]
    %v583 = vstv %s582
    %v584 = vmul.f32 %v513, %v583
    %s585 = sld [smem:[#allocation8 + $0x6e]]
    %v586 = vstv %s585
    %v587 = vmul.f32 %v517, %v586
    %v588 = vadd.f32 %v584, %v587
    %s589 = sld [smem:[#allocation8 + $0x73]]
    %v590 = vstv %s589
    %v591 = vmul.f32 %v521, %v590
    %v592 = vadd.f32 %v588, %v591
    %s593 = sld [smem:[#allocation8 + $0x78]]
    %v594 = vstv %s593
    %v595 = vadd.f32 %v592, %v594
    %v596 = vmax.f32 %v595, 0.0
    %s597 = sld [smem:[#allocation8 + $0x79]]
    %v598 = vstv %s597
    %v599 = vmul.f32 %v536, %v598
    %s600 = sld [smem:[#allocation8 + $0x85]]
    %v601 = vstv %s600
    %v602 = vmul.f32 %v551, %v601
    %v603 = vadd.f32 %v599, %v602
    %s604 = sld [smem:[#allocation8 + $0x91]]
    %v605 = vstv %s604
    %v606 = vmul.f32 %v566, %v605
    %v607 = vadd.f32 %v603, %v606
    %s608 = sld [smem:[#allocation8 + $0x9d]]
    %v609 = vstv %s608
    %v610 = vmul.f32 %v581, %v609
    %v611 = vadd.f32 %v607, %v610
    %s612 = sld [smem:[#allocation8 + $0xa9]]
    %v613 = vstv %s612
    %v614 = vmul.f32 %v596, %v613
    %v615 = vadd.f32 %v611, %v614
    %s616 = sld [smem:[#allocation8 + $0xb5]]
    %v617 = vstv %s616
    %v618 = vadd.f32 %v615, %v617
    %v619 = vxor.u32 %v618, 2147483648
    %v620 = vmul.f32 %v619, 1.442695
    %v621 = vpow.pop %v620
    %v622 = vadd.f32 %v621, 1.0
    %v623 = vrcp.pop %v622
    %v624 = vmul.f32 1.0, %v623
    %625 = vst [vmem:[#allocation9] sm:$0xff] %v624
    %s626 = sld [smem:[#allocation8 + $0x7a]]
    %v627 = vstv %s626
    %v628 = vmul.f32 %v536, %v627
    %s629 = sld [smem:[#allocation8 + $0x86]]
    %v630 = vstv %s629
    %v631 = vmul.f32 %v551, %v630
    %v632 = vadd.f32 %v628, %v631
    %s633 = sld [smem:[#allocation8 + $0x92]]
    %v634 = vstv %s633
    %v635 = vmul.f32 %v566, %v634
    %v636 = vadd.f32 %v632, %v635
    %s637 = sld [smem:[#allocation8 + $0x9e]]
    %v638 = vstv %s637
    %v639 = vmul.f32 %v581, %v638
    %v640 = vadd.f32 %v636, %v639
    %s641 = sld [smem:[#allocation8 + $0xaa]]
    %v642 = vstv %s641
    %v643 = vmul.f32 %v596, %v642
    %v644 = vadd.f32 %v640, %v643
    %s645 = sld [smem:[#allocation8 + $0xb6]]
    %v646 = vstv %s645
    %v647 = vadd.f32 %v644, %v646
    %v648 = vxor.u32 %v647, 2147483648
    %v649 = vmul.f32 %v648, 1.442695
    %v650 = vpow.pop %v649
    %v651 = vadd.f32 %v650, 1.0
    %v652 = vrcp.pop %v651
    %v653 = vmul.f32 1.0, %v652
    %s654 = scalar_lea.vmem [#allocation9], 8
    %655 = vst [vmem:[%s654] sm:$0xff] %v653
    %s656 = sld [smem:[#allocation8 + $0x7b]]
    %v657 = vstv %s656
    %v658 = vmul.f32 %v536, %v657
    %s659 = sld [smem:[#allocation8 + $0x87]]
    %v660 = vstv %s659
    %v661 = vmul.f32 %v551, %v660
    %v662 = vadd.f32 %v658, %v661
    %s663 = sld [smem:[#allocation8 + $0x93]]
    %v664 = vstv %s663
    %v665 = vmul.f32 %v566, %v664
    %v666 = vadd.f32 %v662, %v665
    %s667 = sld [smem:[#allocation8 + $0x9f]]
    %v668 = vstv %s667
    %v669 = vmul.f32 %v581, %v668
    %v670 = vadd.f32 %v666, %v669
    %s671 = sld [smem:[#allocation8 + $0xab]]
    %v672 = vstv %s671
    %v673 = vmul.f32 %v596, %v672
    %v674 = vadd.f32 %v670, %v673
    %s675 = sld [smem:[#allocation8 + $0xb7]]
    %v676 = vstv %s675
    %v677 = vadd.f32 %v674, %v676
    %v678 = vxor.u32 %v677, 2147483648
    %v679 = vmul.f32 %v678, 1.442695
    %v680 = vpow.pop %v679
    %v681 = vadd.f32 %v680, 1.0
    %v682 = vrcp.pop %v681
    %v683 = vmul.f32 1.0, %v682
    %s684 = scalar_lea.vmem [#allocation9], 16
    %685 = vst [vmem:[%s684] sm:$0xff] %v683
    %s686 = sld [smem:[#allocation8 + $0x7c]]
    %v687 = vstv %s686
    %v688 = vmul.f32 %v536, %v687
    %s689 = sld [smem:[#allocation8 + $0x88]]
    %v690 = vstv %s689
    %v691 = vmul.f32 %v551, %v690
    %v692 = vadd.f32 %v688, %v691
    %s693 = sld [smem:[#allocation8 + $0x94]]
    %v694 = vstv %s693
    %v695 = vmul.f32 %v566, %v694
    %v696 = vadd.f32 %v692, %v695
    %s697 = sld [smem:[#allocation8 + $0xa0]]
    %v698 = vstv %s697
    %v699 = vmul.f32 %v581, %v698
    %v700 = vadd.f32 %v696, %v699
    %s701 = sld [smem:[#allocation8 + $0xac]]
    %v702 = vstv %s701
    %v703 = vmul.f32 %v596, %v702
    %v704 = vadd.f32 %v700, %v703
    %s705 = sld [smem:[#allocation8 + $0xb8]]
    %v706 = vstv %s705
    %v707 = vadd.f32 %v704, %v706
    %v708 = vxor.u32 %v707, 2147483648
    %v709 = vmul.f32 %v708, 1.442695
    %v710 = vpow.pop %v709
    %v711 = vadd.f32 %v710, 1.0
    %v712 = vrcp.pop %v711
    %v713 = vmul.f32 1.0, %v712
    %s714 = scalar_lea.vmem [#allocation9], 24
    %715 = vst [vmem:[%s714] sm:$0xff] %v713
    %s716 = sld [smem:[#allocation8 + $0x7d]]
    %v717 = vstv %s716
    %v718 = vmul.f32 %v536, %v717
    %s719 = sld [smem:[#allocation8 + $0x89]]
    %v720 = vstv %s719
    %v721 = vmul.f32 %v551, %v720
    %v722 = vadd.f32 %v718, %v721
    %s723 = sld [smem:[#allocation8 + $0x95]]
    %v724 = vstv %s723
    %v725 = vmul.f32 %v566, %v724
    %v726 = vadd.f32 %v722, %v725
    %s727 = sld [smem:[#allocation8 + $0xa1]]
    %v728 = vstv %s727
    %v729 = vmul.f32 %v581, %v728
    %v730 = vadd.f32 %v726, %v729
    %s731 = sld [smem:[#allocation8 + $0xad]]
    %v732 = vstv %s731
    %v733 = vmul.f32 %v596, %v732
    %v734 = vadd.f32 %v730, %v733
    %s735 = sld [smem:[#allocation8 + $0xb9]]
    %v736 = vstv %s735
    %v737 = vadd.f32 %v734, %v736
    %v738 = vxor.u32 %v737, 2147483648
    %v739 = vmul.f32 %v738, 1.442695
    %v740 = vpow.pop %v739
    %v741 = vadd.f32 %v740, 1.0
    %v742 = vrcp.pop %v741
    %v743 = vmul.f32 1.0, %v742
    %s744 = scalar_lea.vmem [#allocation9], 32
    %745 = vst [vmem:[%s744] sm:$0xff] %v743
    %s746 = sld [smem:[#allocation8 + $0x7e]]
    %v747 = vstv %s746
    %v748 = vmul.f32 %v536, %v747
    %s749 = sld [smem:[#allocation8 + $0x8a]]
    %v750 = vstv %s749
    %v751 = vmul.f32 %v551, %v750
    %v752 = vadd.f32 %v748, %v751
    %s753 = sld [smem:[#allocation8 + $0x96]]
    %v754 = vstv %s753
    %v755 = vmul.f32 %v566, %v754
    %v756 = vadd.f32 %v752, %v755
    %s757 = sld [smem:[#allocation8 + $0xa2]]
    %v758 = vstv %s757
    %v759 = vmul.f32 %v581, %v758
    %v760 = vadd.f32 %v756, %v759
    %s761 = sld [smem:[#allocation8 + $0xae]]
    %v762 = vstv %s761
    %v763 = vmul.f32 %v596, %v762
    %v764 = vadd.f32 %v760, %v763
    %s765 = sld [smem:[#allocation8 + $0xba]]
    %v766 = vstv %s765
    %v767 = vadd.f32 %v764, %v766
    %v768 = vxor.u32 %v767, 2147483648
    %v769 = vmul.f32 %v768, 1.442695
    %v770 = vpow.pop %v769
    %v771 = vadd.f32 %v770, 1.0
    %v772 = vrcp.pop %v771
    %v773 = vmul.f32 1.0, %v772
    %s774 = scalar_lea.vmem [#allocation9], 40
    %775 = vst [vmem:[%s774] sm:$0xff] %v773
    %s776 = sld [smem:[#allocation8 + $0x7f]]
    %v777 = vstv %s776
    %v778 = vmul.f32 %v536, %v777
    %s779 = sld [smem:[#allocation8 + $0x8b]]
    %v780 = vstv %s779
    %v781 = vmul.f32 %v551, %v780
    %v782 = vadd.f32 %v778, %v781
    %s783 = sld [smem:[#allocation8 + $0x97]]
    %v784 = vstv %s783
    %v785 = vmul.f32 %v566, %v784
    %v786 = vadd.f32 %v782, %v785
    %s787 = sld [smem:[#allocation8 + $0xa3]]
    %v788 = vstv %s787
    %v789 = vmul.f32 %v581, %v788
    %v790 = vadd.f32 %v786, %v789
    %s791 = sld [smem:[#allocation8 + $0xaf]]
    %v792 = vstv %s791
    %v793 = vmul.f32 %v596, %v792
    %v794 = vadd.f32 %v790, %v793
    %s795 = sld [smem:[#allocation8 + $0xbb]]
    %v796 = vstv %s795
    %v797 = vadd.f32 %v794, %v796
    %v798 = vxor.u32 %v797, 2147483648
    %v799 = vmul.f32 %v798, 1.442695
    %v800 = vpow.pop %v799
    %v801 = vadd.f32 %v800, 1.0
    %v802 = vrcp.pop %v801
    %v803 = vmul.f32 1.0, %v802
    %s804 = scalar_lea.vmem [#allocation9], 48
    %805 = vst [vmem:[%s804] sm:$0xff] %v803
    %s806 = sld [smem:[#allocation8 + $0x80]]
    %v807 = vstv %s806
    %v808 = vmul.f32 %v536, %v807
    %s809 = sld [smem:[#allocation8 + $0x8c]]
    %v810 = vstv %s809
    %v811 = vmul.f32 %v551, %v810
    %v812 = vadd.f32 %v808, %v811
    %s813 = sld [smem:[#allocation8 + $0x98]]
    %v814 = vstv %s813
    %v815 = vmul.f32 %v566, %v814
    %v816 = vadd.f32 %v812, %v815
    %s817 = sld [smem:[#allocation8 + $0xa4]]
    %v818 = vstv %s817
    %v819 = vmul.f32 %v581, %v818
    %v820 = vadd.f32 %v816, %v819
    %s821 = sld [smem:[#allocation8 + $0xb0]]
    %v822 = vstv %s821
    %v823 = vmul.f32 %v596, %v822
    %v824 = vadd.f32 %v820, %v823
    %s825 = sld [smem:[#allocation8 + $0xbc]]
    %v826 = vstv %s825
    %v827 = vadd.f32 %v824, %v826
    %v828 = vxor.u32 %v827, 2147483648
    %v829 = vmul.f32 %v828, 1.442695
    %v830 = vpow.pop %v829
    %v831 = vadd.f32 %v830, 1.0
    %v832 = vrcp.pop %v831
    %v833 = vmul.f32 1.0, %v832
    %s834 = scalar_lea.vmem [#allocation9], 56
    %835 = vst [vmem:[%s834] sm:$0xff] %v833
    %s836 = sld [smem:[#allocation8 + $0x81]]
    %v837 = vstv %s836
    %v838 = vmul.f32 %v536, %v837
    %s839 = sld [smem:[#allocation8 + $0x8d]]
    %v840 = vstv %s839
    %v841 = vmul.f32 %v551, %v840
    %v842 = vadd.f32 %v838, %v841
    %s843 = sld [smem:[#allocation8 + $0x99]]
    %v844 = vstv %s843
    %v845 = vmul.f32 %v566, %v844
    %v846 = vadd.f32 %v842, %v845
    %s847 = sld [smem:[#allocation8 + $0xa5]]
    %v848 = vstv %s847
    %v849 = vmul.f32 %v581, %v848
    %v850 = vadd.f32 %v846, %v849
    %s851 = sld [smem:[#allocation8 + $0xb1]]
    %v852 = vstv %s851
    %v853 = vmul.f32 %v596, %v852
    %v854 = vadd.f32 %v850, %v853
    %s855 = sld [smem:[#allocation8 + $0xbd]]
    %v856 = vstv %s855
    %v857 = vadd.f32 %v854, %v856
    %v858 = vxor.u32 %v857, 2147483648
    %v859 = vmul.f32 %v858, 1.442695
    %v860 = vpow.pop %v859
    %v861 = vadd.f32 %v860, 1.0
    %v862 = vrcp.pop %v861
    %v863 = vmul.f32 1.0, %v862
    %s864 = scalar_lea.vmem [#allocation9], 64
    %865 = vst [vmem:[%s864] sm:$0xff] %v863
    %s866 = sld [smem:[#allocation8 + $0x82]]
    %v867 = vstv %s866
    %v868 = vmul.f32 %v536, %v867
    %s869 = sld [smem:[#allocation8 + $0x8e]]
    %v870 = vstv %s869
    %v871 = vmul.f32 %v551, %v870
    %v872 = vadd.f32 %v868, %v871
    %s873 = sld [smem:[#allocation8 + $0x9a]]
    %v874 = vstv %s873
    %v875 = vmul.f32 %v566, %v874
    %v876 = vadd.f32 %v872, %v875
    %s877 = sld [smem:[#allocation8 + $0xa6]]
    %v878 = vstv %s877
    %v879 = vmul.f32 %v581, %v878
    %v880 = vadd.f32 %v876, %v879
    %s881 = sld [smem:[#allocation8 + $0xb2]]
    %v882 = vstv %s881
    %v883 = vmul.f32 %v596, %v882
    %v884 = vadd.f32 %v880, %v883
    %s885 = sld [smem:[#allocation8 + $0xbe]]
    %v886 = vstv %s885
    %v887 = vadd.f32 %v884, %v886
    %v888 = vxor.u32 %v887, 2147483648
    %v889 = vmul.f32 %v888, 1.442695
    %v890 = vpow.pop %v889
    %v891 = vadd.f32 %v890, 1.0
    %v892 = vrcp.pop %v891
    %v893 = vmul.f32 1.0, %v892
    %s894 = scalar_lea.vmem [#allocation9], 72
    %895 = vst [vmem:[%s894] sm:$0xff] %v893
    %s896 = sld [smem:[#allocation8 + $0x83]]
    %v897 = vstv %s896
    %v898 = vmul.f32 %v536, %v897
    %s899 = sld [smem:[#allocation8 + $0x8f]]
    %v900 = vstv %s899
    %v901 = vmul.f32 %v551, %v900
    %v902 = vadd.f32 %v898, %v901
    %s903 = sld [smem:[#allocation8 + $0x9b]]
    %v904 = vstv %s903
    %v905 = vmul.f32 %v566, %v904
    %v906 = vadd.f32 %v902, %v905
    %s907 = sld [smem:[#allocation8 + $0xa7]]
    %v908 = vstv %s907
    %v909 = vmul.f32 %v581, %v908
    %v910 = vadd.f32 %v906, %v909
    %s911 = sld [smem:[#allocation8 + $0xb3]]
    %v912 = vstv %s911
    %v913 = vmul.f32 %v596, %v912
    %v914 = vadd.f32 %v910, %v913
    %s915 = sld [smem:[#allocation8 + $0xbf]]
    %v916 = vstv %s915
    %v917 = vadd.f32 %v914, %v916
    %v918 = vxor.u32 %v917, 2147483648
    %v919 = vmul.f32 %v918, 1.442695
    %v920 = vpow.pop %v919
    %v921 = vadd.f32 %v920, 1.0
    %v922 = vrcp.pop %v921
    %v923 = vmul.f32 1.0, %v922
    %s924 = scalar_lea.vmem [#allocation9], 80
    %925 = vst [vmem:[%s924] sm:$0xff] %v923
    %s926 = sld [smem:[#allocation8 + $0x84]]
    %v927 = vstv %s926
    %v928 = vmul.f32 %v536, %v927
    %s929 = sld [smem:[#allocation8 + $0x90]]
    %v930 = vstv %s929
    %v931 = vmul.f32 %v551, %v930
    %v932 = vadd.f32 %v928, %v931
    %s933 = sld [smem:[#allocation8 + $0x9c]]
    %v934 = vstv %s933
    %v935 = vmul.f32 %v566, %v934
    %v936 = vadd.f32 %v932, %v935
    %s937 = sld [smem:[#allocation8 + $0xa8]]
    %v938 = vstv %s937
    %v939 = vmul.f32 %v581, %v938
    %v940 = vadd.f32 %v936, %v939
    %s941 = sld [smem:[#allocation8 + $0xb4]]
    %v942 = vstv %s941
    %v943 = vmul.f32 %v596, %v942
    %v944 = vadd.f32 %v940, %v943
    %s945 = sld [smem:[#allocation8 + $0xc0]]
    %v946 = vstv %s945
    %v947 = vadd.f32 %v944, %v946
    %v948 = vxor.u32 %v947, 2147483648
    %v949 = vmul.f32 %v948, 1.442695
    %v950 = vpow.pop %v949
    %v951 = vadd.f32 %v950, 1.0
    %v952 = vrcp.pop %v951
    %v953 = vmul.f32 1.0, %v952
    %s954 = scalar_lea.vmem [#allocation9], 88
    %955 = vst [vmem:[%s954] sm:$0xff] %v953
    %s956 = scalar_lea.vmem [#allocation9], 96
    %957 = vst [vmem:[%s956] sm:$0xff] %v374
    %v958 = vlog2.pop %v392
    %v959 = vmul.f32 %v958, 0.6931472
    %v960 = vmul.f32 %v959, 2.0
    %s961 = scalar_lea.vmem [#allocation9], 120
    %962 = vst [vmem:[%s961] sm:$0xff] %v960
    %s963 = scalar_lea.vmem [#allocation9], 104
    %964 = vst [vmem:[%s963] sm:$0xff] %v433
    %v965 = vlog2.pop %v451
    %v966 = vmul.f32 %v965, 0.6931472
    %v967 = vmul.f32 %v966, 2.0
    %s968 = scalar_lea.vmem [#allocation9], 128
    %969 = vst [vmem:[%s968] sm:$0xff] %v967
    %s970 = scalar_lea.vmem [#allocation9], 112
    %971 = vst [vmem:[%s970] sm:$0xff] %v492
    %v972 = vlog2.pop %v510
    %v973 = vmul.f32 %v972, 0.6931472
    %v974 = vmul.f32 %v973, 2.0
    %s975 = scalar_lea.vmem [#allocation9], 136
    %976 = vst [vmem:[%s975] sm:$0xff] %v974
    // Predicated region
    $region26: #{tpu_custom_call.1} parent=1 // pred_check
      _
    $region27: #{tpu_custom_call.1} parent=1 // pred_check_branch
      %978 = sbr.rel (0) target = $region29
    $region28: #{tpu_custom_call.1} parent=1 // pred_region
      %s980 = ssub.s32 2304, 2304
      %981 = vsyncadd [#allocation4], %s980
      %s982 = sshll.u32 [#allocation9], 4
      %s983 = int_to_ptr.vmem [resolvable:$true] %s982
      %988 = dma.vmem_to_hbm [thread:$0]  %s983, 2304, %s3, [#allocation4], 128, 128, 8
    $region29: #{tpu_custom_call.1} parent=1 // pred_fallthru
      _
    // Predicated region
    $region30: #{tpu_custom_call.1} parent=1 // pred_check
      _
    $region31: #{tpu_custom_call.1} parent=1 // pred_check_branch
      %990 = sbr.rel (0) target = $region33
    $region32: #{tpu_custom_call.1} parent=1 // pred_region
      %991 = dma.done [#allocation4], 2304
    $region33: #{tpu_custom_call.1} parent=1 // pred_fallthru
      _
    %992 = vsyncpa [#allocation3], 1
    %993 = vsyncpa [#allocation7], 1
    %994 = vsyncpa [#allocation4], 1
    %995 = vsyncpa [#allocation5], 1

</llo_original>
